<compile_context>
chip_gen: v7x
topology: tpu7x:2x2x1
jax: 0.10.0
libtpu: 0.0.40
codegen_flags: <defaults>
</compile_context>

<pallas_src>
import functools

import jax
import jax.numpy as jnp
from jax import lax
from jax.experimental import pallas as pl
from jax.experimental.pallas import tpu as pltpu


def _attention_kernel(x_ref, wqkv_ref, wo_ref, bo_ref, o_ref, out_scratch,
                      *, heads, dim_head):
    inner = heads * dim_head
    # x may arrive as f32 or bf16; the cast is a no-op if already bf16.
    x = x_ref[0].astype(jnp.bfloat16)                                    # (N, D)

    # One fused full-width projection (softmax scale already folded into the
    # Q columns), f32 accumulation on the MXU, then a single cast to bf16.
    qkv = jnp.dot(x, wqkv_ref[...],
                  preferred_element_type=jnp.float32).astype(jnp.bfloat16)  # (N, 3*inner)
    q = qkv[:, :inner]
    k = qkv[:, inner:2 * inner]
    v = qkv[:, 2 * inner:]

    # Per-head attention.  H is small, so a static unroll is fine; each head's
    # result is written to VMEM scratch immediately so its (N, N) score /
    # exp intermediates die before the next head starts (no concat relayout).
    for h in range(heads):
        sl = slice(h * dim_head, (h + 1) * dim_head)
        q_h, k_h, v_h = q[:, sl], k[:, sl], v[:, sl]                     # (N, dh) bf16

        # q k^T without materializing a transpose: contract the last dims.
        dots = lax.dot_general(q_h, k_h, (((1,), (1,)), ((), ())),
                               preferred_element_type=jnp.float32)       # (N, N)
        # Softmax kept in f32 (v5e has no bf16 VPU/EUP); reciprocal on the EUP.
        dots = dots - jnp.max(dots, axis=-1, keepdims=True)
        e = jnp.exp(dots)
        attn = e * pl.reciprocal(jnp.sum(e, axis=-1, keepdims=True), approx=True)

        out_h = jnp.dot(attn.astype(jnp.bfloat16), v_h,
                        preferred_element_type=jnp.float32)              # (N, dh)
        out_scratch[:, sl] = out_h.astype(jnp.bfloat16)

    # Full-width output projection (single inner-wide contraction) + bias.
    o = jnp.dot(out_scratch[...], wo_ref[...],
                preferred_element_type=jnp.float32)                      # (N, D)
    o_ref[0] = (o + bo_ref[...]).astype(o_ref.dtype)


def _vmem_limit_bytes(N, dim, inner, x_itemsize):
    """Right-size the scoped VMEM limit from the actual shapes."""
    bf16, f32 = 2, 4
    weights = dim * 3 * inner * bf16 + inner * dim * bf16 + dim * f32    # resident, 1x
    io = 2 * 2 * N * dim * x_itemsize                                    # x + out, double-buffered
    interm = (N * 3 * inner * (f32 + bf16)        # fused qkv (f32 result + bf16 copy)
              + 2 * N * N * f32                   # one head's scores + exp
              + N * N * bf16                      # attn weights in bf16
              + N * inner * bf16                  # per-head output scratch
              + N * dim * f32)                    # pre-cast f32 output
    est = int((weights + io + interm) * 1.5) + (4 << 20)                 # headroom
    try:
        cap = pltpu.get_tpu_info().vmem_capacity_bytes
    except Exception:
        cap = 64 << 20                            # v7x per-core VMEM (smallest gen)
    return max(32 << 20, min(est, int(cap * 0.85)))


def attention_forward(x, w_qkv, w_out, b_out, *, heads, dim_head):
    """x: (B, N, D); w_qkv: (3*H*dh, D) torch layout; w_out: (D, H*dh); b_out: (D,)."""
    B, N, dim = x.shape
    inner = heads * dim_head
    scale = dim_head ** (-0.5)

    # torch Linear computes x @ W^T; pre-transpose so the kernel does x @ W.
    # Fuse q|k|v into a single (D, 3*inner) weight and fold the softmax scale
    # into the Q columns before the bf16 cast.
    wqkv_t = w_qkv.T                                                      # (D, 3*inner)
    col_scale = jnp.concatenate([jnp.full((inner,), scale, dtype=w_qkv.dtype),
                                 jnp.ones((2 * inner,), dtype=w_qkv.dtype)])
    wqkv = (wqkv_t * col_scale[None, :]).astype(jnp.bfloat16)
    wo = w_out.T.astype(jnp.bfloat16)                                     # (inner, D)
    bo = b_out.reshape(1, dim).astype(jnp.float32)

    kernel = functools.partial(_attention_kernel, heads=heads, dim_head=dim_head)
    vmem_limit = _vmem_limit_bytes(N, dim, inner, x.dtype.itemsize)

    def build(single_buffer_weights):
        # Constant-index-map residents; single-buffer them when supported.
        wkw = {"pipeline_mode": pl.Buffered(1)} if single_buffer_weights else {}
        grid_spec = pltpu.PrefetchScalarGridSpec(
            num_scalar_prefetch=0,
            grid=(B,),
            in_specs=[
                pl.BlockSpec((1, N, dim), lambda b: (b, 0, 0)),                 # x
                pl.BlockSpec((dim, 3 * inner), lambda b: (0, 0), **wkw),        # Wqkv (Q pre-scaled)
                pl.BlockSpec((inner, dim), lambda b: (0, 0), **wkw),            # Wo
                pl.BlockSpec((1, dim), lambda b: (0, 0), **wkw),                # bias
            ],
            out_specs=pl.BlockSpec((1, N, dim), lambda b: (b, 0, 0)),
            scratch_shapes=[pltpu.VMEM((N, inner), jnp.bfloat16)],              # per-head writeback
        )
        return pl.pallas_call(
            kernel,
            out_shape=jax.ShapeDtypeStruct((B, N, dim), x.dtype),
            grid_spec=grid_spec,
            compiler_params=pltpu.CompilerParams(
                dimension_semantics=("parallel",),
                vmem_limit_bytes=vmem_limit,
            ),
        )

    try:
        return build(True)(x, wqkv, wo, bo)
    except Exception:
        # Fallback if this JAX build rejects single-buffered (Buffered(1))
        # resident-weight BlockSpecs: same kernel, default double-buffering.
        return build(False)(x, wqkv, wo, bo)


def attention_reference(x, w_qkv, w_out, b_out, *, heads, dim_head):
    """Pure-JAX f32 reference matching the PyTorch forward exactly."""
    B, N, dim = x.shape
    qkv = x @ w_qkv.T
    q, k, v = jnp.split(qkv, 3, axis=-1)

    def rearr(t):  # 'b n (h d) -> b h n d'
        return jnp.transpose(t.reshape(B, N, heads, dim_head), (0, 2, 1, 3))

    q, k, v = map(rearr, (q, k, v))
    dots = jnp.einsum('bhnd,bhmd->bhnm', q, k) * (dim_head ** -0.5)
    attn = jax.nn.softmax(dots, axis=-1)
    out = jnp.einsum('bhnm,bhmd->bhnd', attn, v)
    out = jnp.transpose(out, (0, 2, 1, 3)).reshape(B, N, heads * dim_head)
    return out @ w_out.T + b_out


if __name__ == "__main__":
    # Small shapes consistent with the module (project_out=True path).
    B, N, DIM = 2, 8, 32
    HEADS, DIM_HEAD = 2, 16
    INNER = HEADS * DIM_HEAD

    key = jax.random.PRNGKey(0)
    kx, kqkv, kwo, kbo = jax.random.split(key, 4)

    x = jax.random.normal(kx, (B, N, DIM), dtype=jnp.float32)
    # Deterministic synthetic parameters (torch Linear weight layouts).
    w_qkv = jax.random.normal(kqkv, (3 * INNER, DIM), dtype=jnp.float32) * 0.05
    w_out = jax.random.normal(kwo, (DIM, INNER), dtype=jnp.float32) * 0.05
    b_out = jax.random.normal(kbo, (DIM,), dtype=jnp.float32) * 0.05

    out = attention_forward(x, w_qkv, w_out, b_out,
                            heads=HEADS, dim_head=DIM_HEAD)
    out = jax.block_until_ready(out)

    ref = attention_reference(x, w_qkv, w_out, b_out,
                              heads=HEADS, dim_head=DIM_HEAD)
    assert out.shape == (B, N, DIM)
    # bf16 matmul operands + approx reciprocal => loose tolerance vs f32 ref.
    max_err = float(jnp.max(jnp.abs(out - ref)))
    assert jnp.allclose(out, ref, atol=3e-2, rtol=3e-2), \
        f"mismatch vs reference, max_abs_err={max_err}"

    print("KERNEL_OK")
</pallas_src>

<mosaic_0001>
module attributes {stable_mosaic.version = 11 : i64} {
  func.func @_attention_kernel(%arg0: i32, %arg1: memref<1x8x32xf32, #tpu.memory_space<vmem>>, %arg2: memref<32x96xbf16, #tpu.memory_space<vmem>>, %arg3: memref<32x32xbf16, #tpu.memory_space<vmem>>, %arg4: memref<1x32xf32, #tpu.memory_space<vmem>>, %arg5: memref<1x8x32xf32, #tpu.memory_space<vmem>>, %arg6: memref<8x32xbf16, #tpu.memory_space<vmem>>) attributes {dimension_semantics = [#tpu.dimension_semantics<parallel>], iteration_bounds = array<i64: 2>, scalar_prefetch = 0 : i64, scratch_operands = 1 : i64, tpu.core_type = #tpu.core_type<tc>, window_params = [{transform_indices = @transform_0, window_bounds = array<i64: 1, 8, 32>}, {pipeline_mode = #tpu.pipeline_mode<synchronous>, transform_indices = @transform_1, window_bounds = array<i64: 32, 96>}, {pipeline_mode = #tpu.pipeline_mode<synchronous>, transform_indices = @transform_2, window_bounds = array<i64: 32, 32>}, {pipeline_mode = #tpu.pipeline_mode<synchronous>, transform_indices = @transform_3, window_bounds = array<i64: 1, 32>}, {transform_indices = @transform_4, window_bounds = array<i64: 1, 8, 32>}]} {
    %c0 = arith.constant 0 : index
    %c0_0 = arith.constant 0 : index
    %c0_1 = arith.constant 0 : index
    %0 = vector.load %arg1[%c0, %c0_0, %c0_1] : memref<1x8x32xf32, #tpu.memory_space<vmem>>, vector<1x8x32xf32>
    %1 = vector.shape_cast %0 : vector<1x8x32xf32> to vector<8x32xf32>
    %2 = arith.truncf %1 : vector<8x32xf32> to vector<8x32xbf16>
    %c0_2 = arith.constant 0 : index
    %c0_3 = arith.constant 0 : index
    %3 = vector.load %arg2[%c0_2, %c0_3] : memref<32x96xbf16, #tpu.memory_space<vmem>>, vector<32x96xbf16>
    %cst = arith.constant dense<0.000000e+00> : vector<8x96xf32>
    %4 = tpu.matmul %2, %3, %cst {dimension_numbers = #tpu.dot_dimension_numbers<[1], [0], [0], [1], [0, 0, 1, 1], [], []>} : vector<8x32xbf16>, vector<32x96xbf16>, vector<8x96xf32> -> vector<8x96xf32>
    %5 = arith.truncf %4 : vector<8x96xf32> to vector<8x96xbf16>
    %6 = vector.extract_strided_slice %5 {offsets = [0, 0], sizes = [8, 32], strides = [1, 1]} : vector<8x96xbf16> to vector<8x32xbf16>
    %7 = vector.extract_strided_slice %5 {offsets = [0, 32], sizes = [8, 32], strides = [1, 1]} : vector<8x96xbf16> to vector<8x32xbf16>
    %8 = vector.extract_strided_slice %5 {offsets = [0, 64], sizes = [8, 32], strides = [1, 1]} : vector<8x96xbf16> to vector<8x32xbf16>
    %9 = vector.extract_strided_slice %6 {offsets = [0, 0], sizes = [8, 16], strides = [1, 1]} : vector<8x32xbf16> to vector<8x16xbf16>
    %10 = vector.extract_strided_slice %7 {offsets = [0, 0], sizes = [8, 16], strides = [1, 1]} : vector<8x32xbf16> to vector<8x16xbf16>
    %11 = vector.extract_strided_slice %8 {offsets = [0, 0], sizes = [8, 16], strides = [1, 1]} : vector<8x32xbf16> to vector<8x16xbf16>
    %cst_4 = arith.constant dense<0.000000e+00> : vector<8x8xf32>
    %12 = tpu.matmul %9, %10, %cst_4 {dimension_numbers = #tpu.dot_dimension_numbers<[1], [1], [0], [0], [0, 0, 1, 0], [], []>} : vector<8x16xbf16>, vector<8x16xbf16>, vector<8x8xf32> -> vector<8x8xf32>
    %cst_5 = arith.constant dense<0xFF800000> : vector<8xf32>
    %13 = vector.multi_reduction <maximumf>, %12, %cst_5 [1] : vector<8x8xf32> to vector<8xf32>
    %14 = vector.shape_cast %13 : vector<8xf32> to vector<8x1xf32>
    %15 = vector.broadcast %14 : vector<8x1xf32> to vector<8x8xf32>
    %16 = arith.subf %12, %15 : vector<8x8xf32>
    %17 = math.exp %16 : vector<8x8xf32>
    %cst_6 = arith.constant dense<0.000000e+00> : vector<8xf32>
    %18 = vector.multi_reduction <add>, %17, %cst_6 [1] : vector<8x8xf32> to vector<8xf32>
    %19 = vector.shape_cast %18 : vector<8xf32> to vector<8x1xf32>
    %20 = tpu.reciprocal %19 {approx = true} : vector<8x1xf32> -> vector<8x1xf32>
    %21 = vector.broadcast %20 : vector<8x1xf32> to vector<8x8xf32>
    %22 = arith.mulf %17, %21 : vector<8x8xf32>
    %23 = arith.truncf %22 : vector<8x8xf32> to vector<8x8xbf16>
    %cst_7 = arith.constant dense<0.000000e+00> : vector<8x16xf32>
    %24 = tpu.matmul %23, %11, %cst_7 {dimension_numbers = #tpu.dot_dimension_numbers<[1], [0], [0], [1], [0, 0, 1, 1], [], []>} : vector<8x8xbf16>, vector<8x16xbf16>, vector<8x16xf32> -> vector<8x16xf32>
    %25 = arith.truncf %24 : vector<8x16xf32> to vector<8x16xbf16>
    %c0_8 = arith.constant 0 : index
    %c0_9 = arith.constant 0 : index
    %26 = vector.load %arg6[%c0_8, %c0_9] : memref<8x32xbf16, #tpu.memory_space<vmem>>, vector<8x16xbf16>
    tpu.vector_store %arg6[%c0_8, %c0_9], %25 {strides = array<i32>} : memref<8x32xbf16, #tpu.memory_space<vmem>>, vector<8x16xbf16>,
    %27 = vector.extract_strided_slice %6 {offsets = [0, 16], sizes = [8, 16], strides = [1, 1]} : vector<8x32xbf16> to vector<8x16xbf16>
    %28 = vector.extract_strided_slice %7 {offsets = [0, 16], sizes = [8, 16], strides = [1, 1]} : vector<8x32xbf16> to vector<8x16xbf16>
    %29 = vector.extract_strided_slice %8 {offsets = [0, 16], sizes = [8, 16], strides = [1, 1]} : vector<8x32xbf16> to vector<8x16xbf16>
    %cst_10 = arith.constant dense<0.000000e+00> : vector<8x8xf32>
    %30 = tpu.matmul %27, %28, %cst_10 {dimension_numbers = #tpu.dot_dimension_numbers<[1], [1], [0], [0], [0, 0, 1, 0], [], []>} : vector<8x16xbf16>, vector<8x16xbf16>, vector<8x8xf32> -> vector<8x8xf32>
    %cst_11 = arith.constant dense<0xFF800000> : vector<8xf32>
    %31 = vector.multi_reduction <maximumf>, %30, %cst_11 [1] : vector<8x8xf32> to vector<8xf32>
    %32 = vector.shape_cast %31 : vector<8xf32> to vector<8x1xf32>
    %33 = vector.broadcast %32 : vector<8x1xf32> to vector<8x8xf32>
    %34 = arith.subf %30, %33 : vector<8x8xf32>
    %35 = math.exp %34 : vector<8x8xf32>
    %cst_12 = arith.constant dense<0.000000e+00> : vector<8xf32>
    %36 = vector.multi_reduction <add>, %35, %cst_12 [1] : vector<8x8xf32> to vector<8xf32>
    %37 = vector.shape_cast %36 : vector<8xf32> to vector<8x1xf32>
    %38 = tpu.reciprocal %37 {approx = true} : vector<8x1xf32> -> vector<8x1xf32>
    %39 = vector.broadcast %38 : vector<8x1xf32> to vector<8x8xf32>
    %40 = arith.mulf %35, %39 : vector<8x8xf32>
    %41 = arith.truncf %40 : vector<8x8xf32> to vector<8x8xbf16>
    %cst_13 = arith.constant dense<0.000000e+00> : vector<8x16xf32>
    %42 = tpu.matmul %41, %29, %cst_13 {dimension_numbers = #tpu.dot_dimension_numbers<[1], [0], [0], [1], [0, 0, 1, 1], [], []>} : vector<8x8xbf16>, vector<8x16xbf16>, vector<8x16xf32> -> vector<8x16xf32>
    %43 = arith.truncf %42 : vector<8x16xf32> to vector<8x16xbf16>
    %c0_14 = arith.constant 0 : index
    %c16 = arith.constant 16 : index
    %44 = vector.load %arg6[%c0_14, %c16] : memref<8x32xbf16, #tpu.memory_space<vmem>>, vector<8x16xbf16>
    tpu.vector_store %arg6[%c0_14, %c16], %43 {strides = array<i32>} : memref<8x32xbf16, #tpu.memory_space<vmem>>, vector<8x16xbf16>,
    %c0_15 = arith.constant 0 : index
    %c0_16 = arith.constant 0 : index
    %45 = vector.load %arg6[%c0_15, %c0_16] : memref<8x32xbf16, #tpu.memory_space<vmem>>, vector<8x32xbf16>
    %c0_17 = arith.constant 0 : index
    %c0_18 = arith.constant 0 : index
    %46 = vector.load %arg3[%c0_17, %c0_18] : memref<32x32xbf16, #tpu.memory_space<vmem>>, vector<32x32xbf16>
    %cst_19 = arith.constant dense<0.000000e+00> : vector<8x32xf32>
    %47 = tpu.matmul %45, %46, %cst_19 {dimension_numbers = #tpu.dot_dimension_numbers<[1], [0], [0], [1], [0, 0, 1, 1], [], []>} : vector<8x32xbf16>, vector<32x32xbf16>, vector<8x32xf32> -> vector<8x32xf32>
    %c0_20 = arith.constant 0 : index
    %c0_21 = arith.constant 0 : index
    %48 = vector.load %arg4[%c0_20, %c0_21] : memref<1x32xf32, #tpu.memory_space<vmem>>, vector<1x32xf32>
    %49 = vector.broadcast %48 : vector<1x32xf32> to vector<8x32xf32>
    %50 = arith.addf %47, %49 : vector<8x32xf32>
    %c0_22 = arith.constant 0 : index
    %c0_23 = arith.constant 0 : index
    %c0_24 = arith.constant 0 : index
    %51 = vector.load %arg5[%c0_22, %c0_23, %c0_24] : memref<1x8x32xf32, #tpu.memory_space<vmem>>, vector<1x8x32xf32>
    %52 = vector.shape_cast %51 : vector<1x8x32xf32> to vector<8x32xf32>
    %53 = vector.shape_cast %50 : vector<8x32xf32> to vector<1x8x32xf32>
    tpu.vector_store %arg5[%c0_22, %c0_23, %c0_24], %53 {strides = array<i32>} : memref<1x8x32xf32, #tpu.memory_space<vmem>>, vector<1x8x32xf32>,
    return
  }
  func.func @transform_0(%arg0: i32) -> (i32, i32, i32) {
    %c0_i32 = arith.constant 0 : i32
    %c0_i32_0 = arith.constant 0 : i32
    %c0_i32_1 = arith.constant 0 : i32
    return %arg0, %c0_i32, %c0_i32_0 : i32, i32, i32
  }
  func.func @transform_1(%arg0: i32) -> (i32, i32) {
    %c0_i32 = arith.constant 0 : i32
    %c0_i32_0 = arith.constant 0 : i32
    %c0_i32_1 = arith.constant 0 : i32
    return %c0_i32, %c0_i32_0 : i32, i32
  }
  func.func @transform_2(%arg0: i32) -> (i32, i32) {
    %c0_i32 = arith.constant 0 : i32
    %c0_i32_0 = arith.constant 0 : i32
    %c0_i32_1 = arith.constant 0 : i32
    return %c0_i32, %c0_i32_0 : i32, i32
  }
  func.func @transform_3(%arg0: i32) -> (i32, i32) {
    %c0_i32 = arith.constant 0 : i32
    %c0_i32_0 = arith.constant 0 : i32
    %c0_i32_1 = arith.constant 0 : i32
    return %c0_i32, %c0_i32_0 : i32, i32
  }
  func.func @transform_4(%arg0: i32) -> (i32, i32, i32) {
    %c0_i32 = arith.constant 0 : i32
    %c0_i32_0 = arith.constant 0 : i32
    %c0_i32_1 = arith.constant 0 : i32
    return %arg0, %c0_i32, %c0_i32_0 : i32, i32, i32
  }
}

module attributes {stable_mosaic.version = 11 : i64} {
  func.func @_attention_kernel(%arg0: i32, %arg1: memref<1x8x32xf32, #tpu.memory_space<vmem>>, %arg2: memref<32x96xbf16, #tpu.memory_space<vmem>>, %arg3: memref<32x32xbf16, #tpu.memory_space<vmem>>, %arg4: memref<1x32xf32, #tpu.memory_space<vmem>>, %arg5: memref<1x8x32xf32, #tpu.memory_space<vmem>>, %arg6: memref<8x32xbf16, #tpu.memory_space<vmem>>) attributes {dimension_semantics = [#tpu.dimension_semantics<parallel>], iteration_bounds = array<i64: 2>, scalar_prefetch = 0 : i64, scratch_operands = 1 : i64, tpu.core_type = #tpu.core_type<tc>, window_params = [{transform_indices = @transform_0, window_bounds = array<i64: 1, 8, 32>}, {pipeline_mode = #tpu.pipeline_mode<synchronous>, transform_indices = @transform_1, window_bounds = array<i64: 32, 96>}, {pipeline_mode = #tpu.pipeline_mode<synchronous>, transform_indices = @transform_2, window_bounds = array<i64: 32, 32>}, {pipeline_mode = #tpu.pipeline_mode<synchronous>, transform_indices = @transform_3, window_bounds = array<i64: 1, 32>}, {transform_indices = @transform_4, window_bounds = array<i64: 1, 8, 32>}]} {
    %c0 = arith.constant 0 : index
    %c0_0 = arith.constant 0 : index
    %c0_1 = arith.constant 0 : index
    %0 = vector.load %arg1[%c0, %c0_0, %c0_1] : memref<1x8x32xf32, #tpu.memory_space<vmem>>, vector<1x8x32xf32>
    %1 = vector.shape_cast %0 : vector<1x8x32xf32> to vector<8x32xf32>
    %2 = arith.truncf %1 : vector<8x32xf32> to vector<8x32xbf16>
    %c0_2 = arith.constant 0 : index
    %c0_3 = arith.constant 0 : index
    %3 = vector.load %arg2[%c0_2, %c0_3] : memref<32x96xbf16, #tpu.memory_space<vmem>>, vector<32x96xbf16>
    %cst = arith.constant dense<0.000000e+00> : vector<8x96xf32>
    %4 = tpu.matmul %2, %3, %cst {dimension_numbers = #tpu.dot_dimension_numbers<[1], [0], [0], [1], [0, 0, 1, 1], [], []>} : vector<8x32xbf16>, vector<32x96xbf16>, vector<8x96xf32> -> vector<8x96xf32>
    %5 = arith.truncf %4 : vector<8x96xf32> to vector<8x96xbf16>
    %6 = vector.extract_strided_slice %5 {offsets = [0, 0], sizes = [8, 32], strides = [1, 1]} : vector<8x96xbf16> to vector<8x32xbf16>
    %7 = vector.extract_strided_slice %5 {offsets = [0, 32], sizes = [8, 32], strides = [1, 1]} : vector<8x96xbf16> to vector<8x32xbf16>
    %8 = vector.extract_strided_slice %5 {offsets = [0, 64], sizes = [8, 32], strides = [1, 1]} : vector<8x96xbf16> to vector<8x32xbf16>
    %9 = vector.extract_strided_slice %6 {offsets = [0, 0], sizes = [8, 16], strides = [1, 1]} : vector<8x32xbf16> to vector<8x16xbf16>
    %10 = vector.extract_strided_slice %7 {offsets = [0, 0], sizes = [8, 16], strides = [1, 1]} : vector<8x32xbf16> to vector<8x16xbf16>
    %11 = vector.extract_strided_slice %8 {offsets = [0, 0], sizes = [8, 16], strides = [1, 1]} : vector<8x32xbf16> to vector<8x16xbf16>
    %cst_4 = arith.constant dense<0.000000e+00> : vector<8x8xf32>
    %12 = tpu.matmul %9, %10, %cst_4 {dimension_numbers = #tpu.dot_dimension_numbers<[1], [1], [0], [0], [0, 0, 1, 0], [], []>} : vector<8x16xbf16>, vector<8x16xbf16>, vector<8x8xf32> -> vector<8x8xf32>
    %cst_5 = arith.constant dense<0xFF800000> : vector<8xf32>
    %13 = vector.multi_reduction <maximumf>, %12, %cst_5 [1] : vector<8x8xf32> to vector<8xf32>
    %14 = vector.shape_cast %13 : vector<8xf32> to vector<8x1xf32>
    %15 = vector.broadcast %14 : vector<8x1xf32> to vector<8x8xf32>
    %16 = arith.subf %12, %15 : vector<8x8xf32>
    %17 = math.exp %16 : vector<8x8xf32>
    %cst_6 = arith.constant dense<0.000000e+00> : vector<8xf32>
    %18 = vector.multi_reduction <add>, %17, %cst_6 [1] : vector<8x8xf32> to vector<8xf32>
    %19 = vector.shape_cast %18 : vector<8xf32> to vector<8x1xf32>
    %20 = tpu.reciprocal %19 {approx = true} : vector<8x1xf32> -> vector<8x1xf32>
    %21 = vector.broadcast %20 : vector<8x1xf32> to vector<8x8xf32>
    %22 = arith.mulf %17, %21 : vector<8x8xf32>
    %23 = arith.truncf %22 : vector<8x8xf32> to vector<8x8xbf16>
    %cst_7 = arith.constant dense<0.000000e+00> : vector<8x16xf32>
    %24 = tpu.matmul %23, %11, %cst_7 {dimension_numbers = #tpu.dot_dimension_numbers<[1], [0], [0], [1], [0, 0, 1, 1], [], []>} : vector<8x8xbf16>, vector<8x16xbf16>, vector<8x16xf32> -> vector<8x16xf32>
    %25 = arith.truncf %24 : vector<8x16xf32> to vector<8x16xbf16>
    %c0_8 = arith.constant 0 : index
    %c0_9 = arith.constant 0 : index
    %26 = vector.load %arg6[%c0_8, %c0_9] : memref<8x32xbf16, #tpu.memory_space<vmem>>, vector<8x16xbf16>
    tpu.vector_store %arg6[%c0_8, %c0_9], %25 {strides = array<i32>} : memref<8x32xbf16, #tpu.memory_space<vmem>>, vector<8x16xbf16>,
    %27 = vector.extract_strided_slice %6 {offsets = [0, 16], sizes = [8, 16], strides = [1, 1]} : vector<8x32xbf16> to vector<8x16xbf16>
    %28 = vector.extract_strided_slice %7 {offsets = [0, 16], sizes = [8, 16], strides = [1, 1]} : vector<8x32xbf16> to vector<8x16xbf16>
    %29 = vector.extract_strided_slice %8 {offsets = [0, 16], sizes = [8, 16], strides = [1, 1]} : vector<8x32xbf16> to vector<8x16xbf16>
    %cst_10 = arith.constant dense<0.000000e+00> : vector<8x8xf32>
    %30 = tpu.matmul %27, %28, %cst_10 {dimension_numbers = #tpu.dot_dimension_numbers<[1], [1], [0], [0], [0, 0, 1, 0], [], []>} : vector<8x16xbf16>, vector<8x16xbf16>, vector<8x8xf32> -> vector<8x8xf32>
    %cst_11 = arith.constant dense<0xFF800000> : vector<8xf32>
    %31 = vector.multi_reduction <maximumf>, %30, %cst_11 [1] : vector<8x8xf32> to vector<8xf32>
    %32 = vector.shape_cast %31 : vector<8xf32> to vector<8x1xf32>
    %33 = vector.broadcast %32 : vector<8x1xf32> to vector<8x8xf32>
    %34 = arith.subf %30, %33 : vector<8x8xf32>
    %35 = math.exp %34 : vector<8x8xf32>
    %cst_12 = arith.constant dense<0.000000e+00> : vector<8xf32>
    %36 = vector.multi_reduction <add>, %35, %cst_12 [1] : vector<8x8xf32> to vector<8xf32>
    %37 = vector.shape_cast %36 : vector<8xf32> to vector<8x1xf32>
    %38 = tpu.reciprocal %37 {approx = true} : vector<8x1xf32> -> vector<8x1xf32>
    %39 = vector.broadcast %38 : vector<8x1xf32> to vector<8x8xf32>
    %40 = arith.mulf %35, %39 : vector<8x8xf32>
    %41 = arith.truncf %40 : vector<8x8xf32> to vector<8x8xbf16>
    %cst_13 = arith.constant dense<0.000000e+00> : vector<8x16xf32>
    %42 = tpu.matmul %41, %29, %cst_13 {dimension_numbers = #tpu.dot_dimension_numbers<[1], [0], [0], [1], [0, 0, 1, 1], [], []>} : vector<8x8xbf16>, vector<8x16xbf16>, vector<8x16xf32> -> vector<8x16xf32>
    %43 = arith.truncf %42 : vector<8x16xf32> to vector<8x16xbf16>
    %c0_14 = arith.constant 0 : index
    %c16 = arith.constant 16 : index
    %44 = vector.load %arg6[%c0_14, %c16] : memref<8x32xbf16, #tpu.memory_space<vmem>>, vector<8x16xbf16>
    tpu.vector_store %arg6[%c0_14, %c16], %43 {strides = array<i32>} : memref<8x32xbf16, #tpu.memory_space<vmem>>, vector<8x16xbf16>,
    %c0_15 = arith.constant 0 : index
    %c0_16 = arith.constant 0 : index
    %45 = vector.load %arg6[%c0_15, %c0_16] : memref<8x32xbf16, #tpu.memory_space<vmem>>, vector<8x32xbf16>
    %c0_17 = arith.constant 0 : index
    %c0_18 = arith.constant 0 : index
    %46 = vector.load %arg3[%c0_17, %c0_18] : memref<32x32xbf16, #tpu.memory_space<vmem>>, vector<32x32xbf16>
    %cst_19 = arith.constant dense<0.000000e+00> : vector<8x32xf32>
    %47 = tpu.matmul %45, %46, %cst_19 {dimension_numbers = #tpu.dot_dimension_numbers<[1], [0], [0], [1], [0, 0, 1, 1], [], []>} : vector<8x32xbf16>, vector<32x32xbf16>, vector<8x32xf32> -> vector<8x32xf32>
    %c0_20 = arith.constant 0 : index
    %c0_21 = arith.constant 0 : index
    %48 = vector.load %arg4[%c0_20, %c0_21] : memref<1x32xf32, #tpu.memory_space<vmem>>, vector<1x32xf32>
    %49 = vector.broadcast %48 : vector<1x32xf32> to vector<8x32xf32>
    %50 = arith.addf %47, %49 : vector<8x32xf32>
    %c0_22 = arith.constant 0 : index
    %c0_23 = arith.constant 0 : index
    %c0_24 = arith.constant 0 : index
    %51 = vector.load %arg5[%c0_22, %c0_23, %c0_24] : memref<1x8x32xf32, #tpu.memory_space<vmem>>, vector<1x8x32xf32>
    %52 = vector.shape_cast %51 : vector<1x8x32xf32> to vector<8x32xf32>
    %53 = vector.shape_cast %50 : vector<8x32xf32> to vector<1x8x32xf32>
    tpu.vector_store %arg5[%c0_22, %c0_23, %c0_24], %53 {strides = array<i32>} : memref<1x8x32xf32, #tpu.memory_space<vmem>>, vector<1x8x32xf32>,
    return
  }
  func.func @transform_0(%arg0: i32) -> (i32, i32, i32) {
    %c0_i32 = arith.constant 0 : i32
    %c0_i32_0 = arith.constant 0 : i32
    %c0_i32_1 = arith.constant 0 : i32
    return %arg0, %c0_i32, %c0_i32_0 : i32, i32, i32
  }
  func.func @transform_1(%arg0: i32) -> (i32, i32) {
    %c0_i32 = arith.constant 0 : i32
    %c0_i32_0 = arith.constant 0 : i32
    %c0_i32_1 = arith.constant 0 : i32
    return %c0_i32, %c0_i32_0 : i32, i32
  }
  func.func @transform_2(%arg0: i32) -> (i32, i32) {
    %c0_i32 = arith.constant 0 : i32
    %c0_i32_0 = arith.constant 0 : i32
    %c0_i32_1 = arith.constant 0 : i32
    return %c0_i32, %c0_i32_0 : i32, i32
  }
  func.func @transform_3(%arg0: i32) -> (i32, i32) {
    %c0_i32 = arith.constant 0 : i32
    %c0_i32_0 = arith.constant 0 : i32
    %c0_i32_1 = arith.constant 0 : i32
    return %c0_i32, %c0_i32_0 : i32, i32
  }
  func.func @transform_4(%arg0: i32) -> (i32, i32, i32) {
    %c0_i32 = arith.constant 0 : i32
    %c0_i32_0 = arith.constant 0 : i32
    %c0_i32_1 = arith.constant 0 : i32
    return %arg0, %c0_i32, %c0_i32_0 : i32, i32, i32
  }
}

</mosaic_0001>

<llo_original>
// kernel: tpu_custom_call.1
$region0: #{tpu_custom_call.1}
  #allocation0 [shape = 'u32[]', space=smem, size = 0x4, offset = 0x4, fixed_abs, tag = 'smem constant byte address 0x4 - core index']
  #allocation1 [shape = 'u32[144,128]{1,0:T(1,128)}', space=vmem, size = 0x12000, scoped, tag = 'internal scratch']
  #allocation2 [shape = 'bf16[8,32]{1,0:T(8,128)(2,1)}', space=vmem, size = 0x800, scoped, tag = 'scratch operand']
  %s0 = inlined_call_operand.hbm [shape: f32[2,8,32], index: 0, kind: input, shape index: {}]
  %s1 = inlined_call_operand.hbm [shape: bf16[32,96], index: 1, kind: input, shape index: {}]
  %s2 = inlined_call_operand.hbm [shape: bf16[32,32], index: 2, kind: input, shape index: {}]
  %s3 = inlined_call_operand.vmem [shape: f32[1,32], index: 3, kind: input, shape index: {}]
  %s4 = inlined_call_operand.hbm [shape: f32[2,8,32], index: 4, kind: output, shape index: {}]
  %s5 = sld [smem:[#allocation0]]
  $region61: #{tpu_custom_call.1} parent=0
    _
  %s7 = ssub.s32 1, %s5
  %s8 = scalar_select 0, %s7, %s5
  $region1: #{tpu_custom_call.1} parent=0
    #allocation3 [shape = 'u8[8192]{0}', space=vmem, size = 0x2000, scoped, tag = 'input window, operand 0']
    #allocation4 [shape = 's32[2]{0}', space=sflag, size = 0x8, scoped, tag = 'scoped memory for tpu_custom_call.1']
    #allocation5 [shape = 's32[2]{0}', space=sflag, size = 0x8, scoped, tag = 'scoped memory for tpu_custom_call.1']
    #allocation6 [shape = 'u8[8192]{0}', space=vmem, size = 0x2000, scoped, tag = 'input window, operand 1, single buffered']
    #allocation7 [shape = 's32[1]{0}', space=sflag, size = 0x4, scoped, tag = 'scoped memory for tpu_custom_call.1']
    #allocation8 [shape = 'u8[8192]{0}', space=vmem, size = 0x2000, scoped, tag = 'input window, operand 2, single buffered']
    #allocation9 [shape = 'u8[8192]{0}', space=vmem, size = 0x2000, scoped, tag = 'output window, operand 0']
    %9 = vsyncpa [#allocation4], 0
    %s10 = scalar_lea.sflag [#allocation4], 1
    %11 = vsyncpa %s10, 0
    %12 = vsyncpa [#allocation7], 0
    %13 = vsyncpa [#allocation5], 0
    %s14 = scalar_lea.sflag [#allocation5], 1
    %15 = vsyncpa %s14, 0
    loop: start=0, step=1, limit=4
    $region2: #{tpu_custom_call.1} parent=1 // loop_pre_header
      _
    $region3: #{tpu_custom_call.1} parent=1 // loop_header
      %s17 = sphi 0, %s21
      %p18 = scmp.ge.s32.totalorder %s17, 4
      %s27 = sphi 0, %s29
      %s30 = sphi 0, %s27
      %s31 = sphi 0, %s30
      %s47 = sphi 0, %s31
      %s51 = sphi 0, %s51
      %s53 = sphi 0, %s51
      %s54 = sphi 0, %s53
      %s68 = sphi 0, %s54
      %s72 = sphi 0, %s72
      %s74 = sphi 0, %s72
      %s75 = sphi 0, %s74
      %s89 = sphi 0, %s75
      %s93 = sphi 0, %s93
      %s95 = sphi 0, %s93
      %s96 = sphi 0, %s95
      %s110 = sphi 0, %s96
      %s116 = sphi 0, %s118
      %s119 = sphi 0, %s116
      %s120 = sphi 0, %s119
      %s136 = sphi 0, %s120
    $region4: #{tpu_custom_call.1} parent=1 // loop_header_branch
      %20 = sbr.rel (%p18) target = $region8
    $region5: #{tpu_custom_call.1} parent=1 // loop_body
      %s22 = ssub.s32 %s17, 1
      %s23 = ssub.s32 %s17, 2
      %s24 = sadd.s32 %s17, 1
      %s25 = ssub.s32 %s17, %s24
      %p26 = scmp.eq.s32.totalorder %s25, 0
      %s28 = sadd.s32 %s27, 1
      %s29 = scalar_select %p26, %s27, %s28
      %p32 = pneg %p26
      %p33 = scmp.eq.s32.totalorder %s17, 1
      %p34 = por %p32, %p33
      %p35 = scmp.ne.s32.totalorder %s27, %s30
      %p36 = scmp.eq.s32.totalorder %s17, 0
      %p37 = por %p35, %p36
      %p38 = scmp.ne.s32.totalorder %s27, %s30
      %p39 = scmp.eq.s32.totalorder %s22, 1
      %p40 = por %p38, %p39
      %p41 = scmp.ne.s32.totalorder %s30, %s31
      %p42 = scmp.eq.s32.totalorder %s22, 0
      %p43 = por %p41, %p42
      %p44 = scmp.ne.s32.totalorder %s30, %s31
      %p45 = scmp.eq.s32.totalorder %s23, 1
      %p46 = por %p44, %p45
      %p48 = scmp.ne.s32.totalorder %s31, %s47
      %p49 = scmp.eq.s32.totalorder %s23, 0
      %p50 = por %p48, %p49
      %s52 = sadd.s32 %s51, 1
      %p55 = scmp.eq.s32.totalorder %s17, 1
      %p56 = scmp.ne.s32.totalorder %s51, %s53
      %p57 = scmp.eq.s32.totalorder %s17, 0
      %p58 = por %p56, %p57
      %p59 = scmp.ne.s32.totalorder %s51, %s53
      %p60 = scmp.eq.s32.totalorder %s22, 1
      %p61 = por %p59, %p60
      %p62 = scmp.ne.s32.totalorder %s53, %s54
      %p63 = scmp.eq.s32.totalorder %s22, 0
      %p64 = por %p62, %p63
      %p65 = scmp.ne.s32.totalorder %s53, %s54
      %p66 = scmp.eq.s32.totalorder %s23, 1
      %p67 = por %p65, %p66
      %p69 = scmp.ne.s32.totalorder %s54, %s68
      %p70 = scmp.eq.s32.totalorder %s23, 0
      %p71 = por %p69, %p70
      %s73 = sadd.s32 %s72, 1
      %p76 = scmp.eq.s32.totalorder %s17, 1
      %p77 = scmp.ne.s32.totalorder %s72, %s74
      %p78 = scmp.eq.s32.totalorder %s17, 0
      %p79 = por %p77, %p78
      %p80 = scmp.ne.s32.totalorder %s72, %s74
      %p81 = scmp.eq.s32.totalorder %s22, 1
      %p82 = por %p80, %p81
      %p83 = scmp.ne.s32.totalorder %s74, %s75
      %p84 = scmp.eq.s32.totalorder %s22, 0
      %p85 = por %p83, %p84
      %p86 = scmp.ne.s32.totalorder %s74, %s75
      %p87 = scmp.eq.s32.totalorder %s23, 1
      %p88 = por %p86, %p87
      %p90 = scmp.ne.s32.totalorder %s75, %s89
      %p91 = scmp.eq.s32.totalorder %s23, 0
      %p92 = por %p90, %p91
      %s94 = sadd.s32 %s93, 1
      %p97 = scmp.eq.s32.totalorder %s17, 1
      %p98 = scmp.ne.s32.totalorder %s93, %s95
      %p99 = scmp.eq.s32.totalorder %s17, 0
      %p100 = por %p98, %p99
      %p101 = scmp.ne.s32.totalorder %s93, %s95
      %p102 = scmp.eq.s32.totalorder %s22, 1
      %p103 = por %p101, %p102
      %p104 = scmp.ne.s32.totalorder %s95, %s96
      %p105 = scmp.eq.s32.totalorder %s22, 0
      %p106 = por %p104, %p105
      %p107 = scmp.ne.s32.totalorder %s95, %s96
      %p108 = scmp.eq.s32.totalorder %s23, 1
      %p109 = por %p107, %p108
      %p111 = scmp.ne.s32.totalorder %s96, %s110
      %p112 = scmp.eq.s32.totalorder %s23, 0
      %p113 = por %p111, %p112
      %s114 = ssub.s32 %s17, %s24
      %p115 = scmp.eq.s32.totalorder %s114, 0
      %s117 = sadd.s32 %s116, 1
      %s118 = scalar_select %p115, %s116, %s117
      %p121 = pneg %p115
      %p122 = scmp.eq.s32.totalorder %s17, 1
      %p123 = por %p121, %p122
      %p124 = scmp.ne.s32.totalorder %s116, %s119
      %p125 = scmp.eq.s32.totalorder %s17, 0
      %p126 = por %p124, %p125
      %p127 = scmp.ne.s32.totalorder %s116, %s119
      %p128 = scmp.eq.s32.totalorder %s22, 1
      %p129 = por %p127, %p128
      %p130 = scmp.ne.s32.totalorder %s119, %s120
      %p131 = scmp.eq.s32.totalorder %s22, 0
      %p132 = por %p130, %p131
      %p133 = scmp.ne.s32.totalorder %s119, %s120
      %p134 = scmp.eq.s32.totalorder %s23, 1
      %p135 = por %p133, %p134
      %p137 = scmp.ne.s32.totalorder %s120, %s136
      %p138 = scmp.eq.s32.totalorder %s23, 0
      %p139 = por %p137, %p138
      %p140 = scmp.le.s32.totalorder 1, %s17
      %p141 = scmp.lt.s32.totalorder %s17, 3
      %p142 = pnand %p140, %p141
      %p143 = pneg %p142
      // Predicated region
      $region9: #{tpu_custom_call.1} parent=5 // pred_check
        _
      $region10: #{tpu_custom_call.1} parent=5 // pred_check_branch
        %145 = sbr.rel (%p142) target = $region12
      $region11: #{tpu_custom_call.1} parent=5 // pred_region
        %s146 = ssub.s32 %s17, 1
        // Predicated region
        $region13: #{tpu_custom_call.1} parent=11 // pred_check
          %p147 = pneg %p64
        $region14: #{tpu_custom_call.1} parent=11 // pred_check_branch
          %149 = sbr.rel (%p147) target = $region16
        $region15: #{tpu_custom_call.1} parent=11 // pred_region
          %s151 = ssub.s32 256, 256
          %152 = vsyncadd [#allocation7], %s151
          %s153 = sshll.u32 [#allocation6], 4
          %s154 = int_to_ptr.vmem [resolvable:$true] %s153
          %159 = dma.hbm_to_vmem [thread:$0]  %s1, 256, %s154, [#allocation7], 64, 64, 4
        $region16: #{tpu_custom_call.1} parent=11 // pred_fallthru
          _
        // Predicated region
        $region17: #{tpu_custom_call.1} parent=11 // pred_check
          %p160 = pneg %p85
        $region18: #{tpu_custom_call.1} parent=11 // pred_check_branch
          %162 = sbr.rel (%p160) target = $region20
        $region19: #{tpu_custom_call.1} parent=11 // pred_region
          %s164 = ssub.s32 256, 256
          %165 = vsyncadd [#allocation7], %s164
          %s166 = sshll.u32 [#allocation8], 4
          %s167 = int_to_ptr.vmem [resolvable:$true] %s166
          %172 = dma.hbm_to_vmem [thread:$0]  %s2, 256, %s167, [#allocation7], 64, 64, 4
        $region20: #{tpu_custom_call.1} parent=11 // pred_fallthru
          _
        // Predicated region
        $region21: #{tpu_custom_call.1} parent=11 // pred_check
          %p173 = pneg %p106
        $region22: #{tpu_custom_call.1} parent=11 // pred_check_branch
          %175 = sbr.rel (%p173) target = $region24
        $region23: #{tpu_custom_call.1} parent=11 // pred_region
          _
        $region24: #{tpu_custom_call.1} parent=11 // pred_fallthru
          _
      $region12: #{tpu_custom_call.1} parent=5 // pred_fallthru
        _
      %p176 = scmp.lt.s32.totalorder %s17, 2
      // Predicated region
      $region25: #{tpu_custom_call.1} parent=5 // pred_check
        %p177 = pneg %p176
      $region26: #{tpu_custom_call.1} parent=5 // pred_check_branch
        %179 = sbr.rel (%p177) target = $region28
      $region27: #{tpu_custom_call.1} parent=5 // pred_region
        // Predicated region
        $region29: #{tpu_custom_call.1} parent=27 // pred_check
          %p180 = pneg %p37
        $region30: #{tpu_custom_call.1} parent=27 // pred_check_branch
          %182 = sbr.rel (%p180) target = $region32
        $region31: #{tpu_custom_call.1} parent=27 // pred_region
          %s183 = sand.u32 %s27, 1
          %s184 = scalar_lea.sflag [#allocation4], %s183
          %s185 = sand.u32 %s27, 1
          %s186 = smul.addr %s185, 8
          %s187 = scalar_lea.vmem [#allocation3], %s186
          %s189 = ssub.s32 128, 128
          %190 = vsyncadd %s184, %s189
          %s191 = smul.addr %s17, 128
          %s192 = scalar_lea.hbm %s0, %s191
          %s194 = sshll.u32 %s187, 4
          %s195 = int_to_ptr.vmem [resolvable:$true] %s194
          %197 = dma.hbm_to_vmem [thread:$0]  %s192, 128, %s195, %s184
        $region32: #{tpu_custom_call.1} parent=27 // pred_fallthru
          _
      $region28: #{tpu_custom_call.1} parent=5 // pred_fallthru
        _
      %p198 = scmp.le.s32.totalorder 1, %s17
      %p199 = scmp.lt.s32.totalorder %s17, 3
      %p200 = pnand %p198, %p199
      %p201 = pneg %p200
      // Predicated region
      $region33: #{tpu_custom_call.1} parent=5 // pred_check
        _
      $region34: #{tpu_custom_call.1} parent=5 // pred_check_branch
        %203 = sbr.rel (%p200) target = $region36
      $region35: #{tpu_custom_call.1} parent=5 // pred_region
        %s204 = ssub.s32 %s17, 1
        %s205 = sand.u32 %s30, 1
        %s206 = scalar_lea.sflag [#allocation4], %s205
        %s207 = sand.u32 %s30, 1
        %s208 = smul.addr %s207, 8
        %s209 = scalar_lea.vmem [#allocation3], %s208
        // Predicated region
        $region37: #{tpu_custom_call.1} parent=35 // pred_check
          %p210 = pneg %p43
        $region38: #{tpu_custom_call.1} parent=35 // pred_check_branch
          %212 = sbr.rel (%p210) target = $region40
        $region39: #{tpu_custom_call.1} parent=35 // pred_region
          %213 = dma.done %s206, 128
        $region40: #{tpu_custom_call.1} parent=35 // pred_fallthru
          _
        // Predicated region
        $region41: #{tpu_custom_call.1} parent=35 // pred_check
          %p214 = pneg %p64
        $region42: #{tpu_custom_call.1} parent=35 // pred_check_branch
          %216 = sbr.rel (%p214) target = $region44
        $region43: #{tpu_custom_call.1} parent=35 // pred_region
          %217 = dma.done [#allocation7], 256
        $region44: #{tpu_custom_call.1} parent=35 // pred_fallthru
          _
        // Predicated region
        $region45: #{tpu_custom_call.1} parent=35 // pred_check
          %p218 = pneg %p85
        $region46: #{tpu_custom_call.1} parent=35 // pred_check_branch
          %220 = sbr.rel (%p218) target = $region48
        $region47: #{tpu_custom_call.1} parent=35 // pred_region
          %221 = dma.done [#allocation7], 256
        $region48: #{tpu_custom_call.1} parent=35 // pred_fallthru
          _
        %s222 = sand.u32 %s30, 1
        %s223 = scalar_lea.sflag [#allocation4], %s222
        %s224 = sand.u32 %s30, 1
        %s225 = smul.addr %s224, 8
        %s226 = scalar_lea.vmem [#allocation3], %s225
        %p227 = pneg %p43
        %p228 = pneg %p40
        %p229 = pneg %p64
        %p230 = pneg %p61
        %p231 = pneg %p85
        %p232 = pneg %p82
        %p233 = pneg %p106
        %p234 = pneg %p103
        %p235 = pneg %p132
        %p236 = pneg %p129
        %s237 = sand.u32 %s119, 1
        %s238 = scalar_lea.sflag [#allocation5], %s237
        %s239 = sand.u32 %s119, 1
        %s240 = smul.addr %s239, 8
        %s241 = scalar_lea.vmem [#allocation9], %s240
        %v243 = vld [vmem:[%s209] sm:$0xff]
        %v244 = vpack.c.bf16 %v243, %v243
        %v245 = vld [vmem:[#allocation6] sm:$0xf]
        %v246 = vld [vmem:[#allocation6 + $0x4] sm:$0xf]
        %v247 = vld [vmem:[#allocation6 + $0x8] sm:$0xf]
        %v248 = vld [vmem:[#allocation6 + $0xc] sm:$0xf]
        %v253 = vunpack.c.l.b16 %v245
        %v254 = vunpack.c.l.b16 %v246
        %v255 = vunpack.c.l.b16 %v247
        %v256 = vunpack.c.l.b16 %v248
        %v257 = vpack.c.b16 %v254, %v253
        %v258 = vpack.c.b16 %v256, %v255
        %vm261 = vcmask 261120
        %v263 = vsel %vm261, %v244, 0
        %265 = vmatprep.subr.bf16.mxu0 0
        %266 = vmatpush1.bf16.msra.mxu0 %v257
        %267 = vmatprep.subr.bf16.mxu0 0
        %268 = vmatpush1.bf16.msra.mxu0 %v258
        %269 = vmatprep.subr.bf16.mxu0 0
        %270 = vmatpush1.bf16.msra.mxu0 0
        %271 = vmatprep.subr.bf16.mxu0 0
        %272 = vmatpush1.bf16.msra.mxu0 0
        %273 = vmatprep.subr.bf16.mxu0 0
        %274 = vmatpush1.bf16.msra.mxu0 0
        %275 = vmatprep.subr.bf16.mxu0 0
        %276 = vmatpush1.bf16.msra.mxu0 0
        %277 = vmatprep.subr.bf16.mxu0 0
        %278 = vmatpush1.bf16.msra.mxu0 0
        %279 = vmatprep.subr.bf16.mxu0 0
        %280 = vmatpush1.bf16.msra.mxu0 0
        %281 = vmatprep.subr.bf16.mxu0 0
        %282 = vmatpush1.bf16.msra.mxu0 0
        %283 = vmatprep.subr.bf16.mxu0 0
        %284 = vmatpush1.bf16.msra.mxu0 0
        %285 = vmatprep.subr.bf16.mxu0 0
        %286 = vmatpush1.bf16.msra.mxu0 0
        %287 = vmatprep.subr.bf16.mxu0 0
        %288 = vmatpush1.bf16.msra.mxu0 0
        %289 = vmatprep.subr.bf16.mxu0 0
        %290 = vmatpush1.bf16.msra.mxu0 0
        %291 = vmatprep.subr.bf16.mxu0 0
        %292 = vmatpush1.bf16.msra.mxu0 0
        %293 = vmatprep.subr.bf16.mxu0 0
        %294 = vmatpush1.bf16.msra.mxu0 0
        %295 = vmatprep.subr.bf16.mxu0 0
        %296 = vmatpush1.bf16.msra.mxu0 0
        %297 = vmatprep.mubr.bf16.mxu0 0
        %298 = vmatmul.mubr.bf16.gmra.mrb[0].mxu0 %v263
        %v299 = vpop.f32.mrb[0].mxu0
        %v300 = vadd.f32 0.0, %v299
        %v301 = vpop.f32.mrb[0].mxu0
        %v302 = vpop.f32.mrb[0].mxu0
        %v303 = vpop.f32.mrb[0].mxu0
        %304 = vdwg.mxu0
        %v305 = vpack.c.bf16 %v300, %v300
        %307 = vrot.lane.b32.xlu0 %v305, 96
        %v308 = vpop.permute.xlu0 %307
        %vm309 = vcmask 130048
        %v311 = vsel %vm309, %v305, 0
        %v314 = vsel %vm309, %v308, 0
        %316 = vmatprep.subr.bf16.mxu0 0
        %317 = vmatpush1.bf16.xpose.msra.mxu0 %v314
        %318 = vmatprep.subr.bf16.mxu0 0
        %319 = vmatpush1.bf16.xpose.msra.mxu0 0
        %320 = vmatprep.subr.bf16.mxu0 0
        %321 = vmatpush1.bf16.xpose.msra.mxu0 0
        %322 = vmatprep.subr.bf16.mxu0 0
        %323 = vmatpush1.bf16.xpose.msra.mxu0 0
        %324 = vmatprep.subr.bf16.mxu0 0
        %325 = vmatpush1.bf16.xpose.msra.mxu0 0
        %326 = vmatprep.subr.bf16.mxu0 0
        %327 = vmatpush1.bf16.xpose.msra.mxu0 0
        %328 = vmatprep.subr.bf16.mxu0 0
        %329 = vmatpush1.bf16.xpose.msra.mxu0 0
        %330 = vmatprep.subr.bf16.mxu0 0
        %331 = vmatpush1.bf16.xpose.msra.mxu0 0
        %332 = vmatprep.subr.bf16.mxu0 0
        %333 = vmatpush1.bf16.xpose.msra.mxu0 0
        %334 = vmatprep.subr.bf16.mxu0 0
        %335 = vmatpush1.bf16.xpose.msra.mxu0 0
        %336 = vmatprep.subr.bf16.mxu0 0
        %337 = vmatpush1.bf16.xpose.msra.mxu0 0
        %338 = vmatprep.subr.bf16.mxu0 0
        %339 = vmatpush1.bf16.xpose.msra.mxu0 0
        %340 = vmatprep.subr.bf16.mxu0 0
        %341 = vmatpush1.bf16.xpose.msra.mxu0 0
        %342 = vmatprep.subr.bf16.mxu0 0
        %343 = vmatpush1.bf16.xpose.msra.mxu0 0
        %344 = vmatprep.subr.bf16.mxu0 0
        %345 = vmatpush1.bf16.xpose.msra.mxu0 0
        %346 = vmatprep.subr.bf16.mxu0 0
        %347 = vmatpush1.bf16.xpose.msra.mxu0 0
        %348 = vmatprep.mubr.bf16.mxu0 0
        %349 = vmatmul.mubr.bf16.gmra.mrb[0].mxu0 %v311
        %v350 = vpop.f32.mrb[0].mxu0
        %v351 = vadd.f32 0.0, %v350
        %v352 = vpop.f32.mrb[0].mxu0
        %v353 = vpop.f32.mrb[0].mxu0
        %v354 = vpop.f32.mrb[0].mxu0
        %355 = vdwg.mxu0
        %vm356 = vcmask 64512
        %v357 = vsel %vm356, %v351, -inf
        %358 = vmax.xlane.f32.xlu0 %v357
        %v359 = vpop.xlane.xlu0 %358
        %v360 = vsub.f32 %v351, %v359
        %v361 = vmul.f32 %v360, 1.442695
        %v362 = vpow.pop %v361
        %v363 = vsel %vm356, %v362, 0.0
        %364 = vadd.xlane.f32.xlu0 %v363
        %v365 = vpop.xlane.xlu0 %364
        %v366 = vrcp.pop %v365
        %v367 = vmul.f32 %v362, %v366
        %v368 = vpack.c.bf16 %v367, %v367
        %369 = vrot.lane.b32.xlu0 %v305, 64
        %v370 = vpop.permute.xlu0 %369
        %v372 = vsel %vm356, %v368, 0
        %vm374 = vcmask 1043456
        %v376 = vsel %vm374, %v370, 0
        %378 = vmatprep.subr.bf16.mxu0 0
        %379 = vmatpush1.bf16.msra.mxu0 %v376
        %380 = vmatprep.subr.bf16.mxu0 0
        %381 = vmatpush1.bf16.msra.mxu0 0
        %382 = vmatprep.subr.bf16.mxu0 0
        %383 = vmatpush1.bf16.msra.mxu0 0
        %384 = vmatprep.subr.bf16.mxu0 0
        %385 = vmatpush1.bf16.msra.mxu0 0
        %386 = vmatprep.subr.bf16.mxu0 0
        %387 = vmatpush1.bf16.msra.mxu0 0
        %388 = vmatprep.subr.bf16.mxu0 0
        %389 = vmatpush1.bf16.msra.mxu0 0
        %390 = vmatprep.subr.bf16.mxu0 0
        %391 = vmatpush1.bf16.msra.mxu0 0
        %392 = vmatprep.subr.bf16.mxu0 0
        %393 = vmatpush1.bf16.msra.mxu0 0
        %394 = vmatprep.subr.bf16.mxu0 0
        %395 = vmatpush1.bf16.msra.mxu0 0
        %396 = vmatprep.subr.bf16.mxu0 0
        %397 = vmatpush1.bf16.msra.mxu0 0
        %398 = vmatprep.subr.bf16.mxu0 0
        %399 = vmatpush1.bf16.msra.mxu0 0
        %400 = vmatprep.subr.bf16.mxu0 0
        %401 = vmatpush1.bf16.msra.mxu0 0
        %402 = vmatprep.subr.bf16.mxu0 0
        %403 = vmatpush1.bf16.msra.mxu0 0
        %404 = vmatprep.subr.bf16.mxu0 0
        %405 = vmatpush1.bf16.msra.mxu0 0
        %406 = vmatprep.subr.bf16.mxu0 0
        %407 = vmatpush1.bf16.msra.mxu0 0
        %408 = vmatprep.subr.bf16.mxu0 0
        %409 = vmatpush1.bf16.msra.mxu0 0
        %410 = vmatprep.mubr.bf16.mxu0 0
        %411 = vmatmul.mubr.bf16.gmra.mrb[0].mxu0 %v372
        %v412 = vpop.f32.mrb[0].mxu0
        %v413 = vadd.f32 0.0, %v412
        %v414 = vpop.f32.mrb[0].mxu0
        %v415 = vpop.f32.mrb[0].mxu0
        %v416 = vpop.f32.mrb[0].mxu0
        %417 = vdwg.mxu0
        %v418 = vpack.c.bf16 %v413, %v413
        %vm419 = vcmask 125952
        %420 = vst.msk [vmem:[#allocation2] sm:$0xf] %vm419, %v418
        %421 = vrot.lane.b32.xlu0 %v305, 112
        %v422 = vpop.permute.xlu0 %421
        %423 = vrot.lane.b32.xlu0 %v305, 80
        %v424 = vpop.permute.xlu0 %423
        %v426 = vsel %vm309, %v422, 0
        %v429 = vsel %vm309, %v424, 0
        %431 = vmatprep.subr.bf16.mxu0 0
        %432 = vmatpush1.bf16.xpose.msra.mxu0 %v429
        %433 = vmatprep.subr.bf16.mxu0 0
        %434 = vmatpush1.bf16.xpose.msra.mxu0 0
        %435 = vmatprep.subr.bf16.mxu0 0
        %436 = vmatpush1.bf16.xpose.msra.mxu0 0
        %437 = vmatprep.subr.bf16.mxu0 0
        %438 = vmatpush1.bf16.xpose.msra.mxu0 0
        %439 = vmatprep.subr.bf16.mxu0 0
        %440 = vmatpush1.bf16.xpose.msra.mxu0 0
        %441 = vmatprep.subr.bf16.mxu0 0
        %442 = vmatpush1.bf16.xpose.msra.mxu0 0
        %443 = vmatprep.subr.bf16.mxu0 0
        %444 = vmatpush1.bf16.xpose.msra.mxu0 0
        %445 = vmatprep.subr.bf16.mxu0 0
        %446 = vmatpush1.bf16.xpose.msra.mxu0 0
        %447 = vmatprep.subr.bf16.mxu0 0
        %448 = vmatpush1.bf16.xpose.msra.mxu0 0
        %449 = vmatprep.subr.bf16.mxu0 0
        %450 = vmatpush1.bf16.xpose.msra.mxu0 0
        %451 = vmatprep.subr.bf16.mxu0 0
        %452 = vmatpush1.bf16.xpose.msra.mxu0 0
        %453 = vmatprep.subr.bf16.mxu0 0
        %454 = vmatpush1.bf16.xpose.msra.mxu0 0
        %455 = vmatprep.subr.bf16.mxu0 0
        %456 = vmatpush1.bf16.xpose.msra.mxu0 0
        %457 = vmatprep.subr.bf16.mxu0 0
        %458 = vmatpush1.bf16.xpose.msra.mxu0 0
        %459 = vmatprep.subr.bf16.mxu0 0
        %460 = vmatpush1.bf16.xpose.msra.mxu0 0
        %461 = vmatprep.subr.bf16.mxu0 0
        %462 = vmatpush1.bf16.xpose.msra.mxu0 0
        %463 = vmatprep.mubr.bf16.mxu0 0
        %464 = vmatmul.mubr.bf16.gmra.mrb[0].mxu0 %v426
        %v465 = vpop.f32.mrb[0].mxu0
        %v466 = vadd.f32 0.0, %v465
        %v467 = vpop.f32.mrb[0].mxu0
        %v468 = vpop.f32.mrb[0].mxu0
        %v469 = vpop.f32.mrb[0].mxu0
        %470 = vdwg.mxu0
        %v471 = vsel %vm356, %v466, -inf
        %472 = vmax.xlane.f32.xlu0 %v471
        %v473 = vpop.xlane.xlu0 %472
        %v474 = vsub.f32 %v466, %v473
        %v475 = vmul.f32 %v474, 1.442695
        %v476 = vpow.pop %v475
        %v477 = vsel %vm356, %v476, 0.0
        %478 = vadd.xlane.f32.xlu0 %v477
        %v479 = vpop.xlane.xlu0 %478
        %v480 = vrcp.pop %v479
        %v481 = vmul.f32 %v476, %v480
        %v482 = vpack.c.bf16 %v481, %v481
        %483 = vrot.lane.b32.xlu0 %v305, 48
        %v484 = vpop.permute.xlu0 %483
        %v486 = vsel %vm356, %v482, 0
        %v489 = vsel %vm374, %v484, 0
        %491 = vmatprep.subr.bf16.mxu0 0
        %492 = vmatpush1.bf16.msra.mxu0 %v489
        %493 = vmatprep.subr.bf16.mxu0 0
        %494 = vmatpush1.bf16.msra.mxu0 0
        %495 = vmatprep.subr.bf16.mxu0 0
        %496 = vmatpush1.bf16.msra.mxu0 0
        %497 = vmatprep.subr.bf16.mxu0 0
        %498 = vmatpush1.bf16.msra.mxu0 0
        %499 = vmatprep.subr.bf16.mxu0 0
        %500 = vmatpush1.bf16.msra.mxu0 0
        %501 = vmatprep.subr.bf16.mxu0 0
        %502 = vmatpush1.bf16.msra.mxu0 0
        %503 = vmatprep.subr.bf16.mxu0 0
        %504 = vmatpush1.bf16.msra.mxu0 0
        %505 = vmatprep.subr.bf16.mxu0 0
        %506 = vmatpush1.bf16.msra.mxu0 0
        %507 = vmatprep.subr.bf16.mxu0 0
        %508 = vmatpush1.bf16.msra.mxu0 0
        %509 = vmatprep.subr.bf16.mxu0 0
        %510 = vmatpush1.bf16.msra.mxu0 0
        %511 = vmatprep.subr.bf16.mxu0 0
        %512 = vmatpush1.bf16.msra.mxu0 0
        %513 = vmatprep.subr.bf16.mxu0 0
        %514 = vmatpush1.bf16.msra.mxu0 0
        %515 = vmatprep.subr.bf16.mxu0 0
        %516 = vmatpush1.bf16.msra.mxu0 0
        %517 = vmatprep.subr.bf16.mxu0 0
        %518 = vmatpush1.bf16.msra.mxu0 0
        %519 = vmatprep.subr.bf16.mxu0 0
        %520 = vmatpush1.bf16.msra.mxu0 0
        %521 = vmatprep.subr.bf16.mxu0 0
        %522 = vmatpush1.bf16.msra.mxu0 0
        %523 = vmatprep.mubr.bf16.mxu0 0
        %524 = vmatmul.mubr.bf16.gmra.mrb[0].mxu0 %v486
        %v525 = vpop.f32.mrb[0].mxu0
        %v526 = vadd.f32 0.0, %v525
        %v527 = vpop.f32.mrb[0].mxu0
        %v528 = vpop.f32.mrb[0].mxu0
        %v529 = vpop.f32.mrb[0].mxu0
        %530 = vdwg.mxu0
        %v531 = vpack.c.bf16 %v526, %v526
        %v533 = vunpack.c.l.b16 %v531
        %v534 = vpack.c.b16 %v533, %v533
        %535 = vrot.lane.b32.xlu0 %v534, 16
        %v536 = vpop.permute.xlu0 %535
        %vm538 = vcmask 257152
        %539 = vst.msk [vmem:[#allocation2] sm:$0xf] %vm538, %v536
        %v540 = vld [vmem:[#allocation2] sm:$0xf]
        %v541 = vld [vmem:[#allocation8] sm:$0xf]
        %v542 = vld [vmem:[#allocation8 + $0x4] sm:$0xf]
        %v543 = vld [vmem:[#allocation8 + $0x8] sm:$0xf]
        %v544 = vld [vmem:[#allocation8 + $0xc] sm:$0xf]
        %v545 = vld [vmem:[%s3] sm:$0x1]
        %v547 = vlaneseq
        %v548 = vshrl.u32 %v547, 7
        %v549 = vsub.s32 0, %v548
        %v550 = vrot.slane %v545, %v549
        %v556 = vunpack.c.l.b16 %v541
        %v557 = vunpack.c.l.b16 %v542
        %v558 = vunpack.c.l.b16 %v543
        %v559 = vunpack.c.l.b16 %v544
        %v560 = vpack.c.b16 %v557, %v556
        %v561 = vpack.c.b16 %v559, %v558
        %v565 = vsel %vm261, %v540, 0
        %567 = vmatprep.subr.bf16.mxu0 0
        %568 = vmatpush1.bf16.msra.mxu0 %v560
        %569 = vmatprep.subr.bf16.mxu0 0
        %570 = vmatpush1.bf16.msra.mxu0 %v561
        %571 = vmatprep.subr.bf16.mxu0 0
        %572 = vmatpush1.bf16.msra.mxu0 0
        %573 = vmatprep.subr.bf16.mxu0 0
        %574 = vmatpush1.bf16.msra.mxu0 0
        %575 = vmatprep.subr.bf16.mxu0 0
        %576 = vmatpush1.bf16.msra.mxu0 0
        %577 = vmatprep.subr.bf16.mxu0 0
        %578 = vmatpush1.bf16.msra.mxu0 0
        %579 = vmatprep.subr.bf16.mxu0 0
        %580 = vmatpush1.bf16.msra.mxu0 0
        %581 = vmatprep.subr.bf16.mxu0 0
        %582 = vmatpush1.bf16.msra.mxu0 0
        %583 = vmatprep.subr.bf16.mxu0 0
        %584 = vmatpush1.bf16.msra.mxu0 0
        %585 = vmatprep.subr.bf16.mxu0 0
        %586 = vmatpush1.bf16.msra.mxu0 0
        %587 = vmatprep.subr.bf16.mxu0 0
        %588 = vmatpush1.bf16.msra.mxu0 0
        %589 = vmatprep.subr.bf16.mxu0 0
        %590 = vmatpush1.bf16.msra.mxu0 0
        %591 = vmatprep.subr.bf16.mxu0 0
        %592 = vmatpush1.bf16.msra.mxu0 0
        %593 = vmatprep.subr.bf16.mxu0 0
        %594 = vmatpush1.bf16.msra.mxu0 0
        %595 = vmatprep.subr.bf16.mxu0 0
        %596 = vmatpush1.bf16.msra.mxu0 0
        %597 = vmatprep.subr.bf16.mxu0 0
        %598 = vmatpush1.bf16.msra.mxu0 0
        %599 = vmatprep.mubr.bf16.mxu0 0
        %600 = vmatmul.mubr.bf16.gmra.mrb[0].mxu0 %v565
        %v601 = vpop.f32.mrb[0].mxu0
        %v602 = vadd.f32 %v550, %v601
        %v603 = vpop.f32.mrb[0].mxu0
        %v604 = vpop.f32.mrb[0].mxu0
        %v605 = vpop.f32.mrb[0].mxu0
        %606 = vdwg.mxu0
        %607 = vst.msk [vmem:[%s241] sm:$0xff] %vm261, %v602
        %s608 = sand.u32 %s119, 1
        %s609 = scalar_lea.sflag [#allocation5], %s608
        %s610 = sand.u32 %s119, 1
        %s611 = smul.addr %s610, 8
        %s612 = scalar_lea.vmem [#allocation9], %s611
        // Predicated region
        $region49: #{tpu_custom_call.1} parent=35 // pred_check
          %p613 = pneg %p129
        $region50: #{tpu_custom_call.1} parent=35 // pred_check_branch
          %615 = sbr.rel (%p613) target = $region52
        $region51: #{tpu_custom_call.1} parent=35 // pred_region
          %s617 = ssub.s32 128, 128
          %618 = vsyncadd %s609, %s617
          %s619 = smul.addr %s22, 128
          %s620 = scalar_lea.hbm %s4, %s619
          %s622 = sshll.u32 %s612, 4
          %s623 = int_to_ptr.vmem [resolvable:$true] %s622
          %625 = dma.vmem_to_hbm [thread:$0]  %s623, 128, %s620, %s609
        $region52: #{tpu_custom_call.1} parent=35 // pred_fallthru
          _
      $region36: #{tpu_custom_call.1} parent=5 // pred_fallthru
        _
      %p626 = scmp.le.s32.totalorder 2, %s17
      // Predicated region
      $region53: #{tpu_custom_call.1} parent=5 // pred_check
        %p627 = pneg %p626
      $region54: #{tpu_custom_call.1} parent=5 // pred_check_branch
        %629 = sbr.rel (%p627) target = $region56
      $region55: #{tpu_custom_call.1} parent=5 // pred_region
        %s630 = ssub.s32 %s17, 2
        // Predicated region
        $region57: #{tpu_custom_call.1} parent=55 // pred_check
          %p631 = pneg %p135
        $region58: #{tpu_custom_call.1} parent=55 // pred_check_branch
          %633 = sbr.rel (%p631) target = $region60
        $region59: #{tpu_custom_call.1} parent=55 // pred_region
          %s634 = sand.u32 %s120, 1
          %s635 = scalar_lea.sflag [#allocation5], %s634
          %s636 = sand.u32 %s120, 1
          %s637 = smul.addr %s636, 8
          %s638 = scalar_lea.vmem [#allocation9], %s637
          %639 = dma.done %s635, 128
        $region60: #{tpu_custom_call.1} parent=55 // pred_fallthru
          _
      $region56: #{tpu_custom_call.1} parent=5 // pred_fallthru
        _
    $region6: #{tpu_custom_call.1} parent=1 // loop_footer
      %s21 = sadd.s32 1, %s17
    $region7: #{tpu_custom_call.1} parent=1 // loop_footer_branch
      %16 = sbr.rel target = $region3
    $region8: #{tpu_custom_call.1} parent=1 // loop_exit
      _
    %640 = vsyncpa [#allocation4], 1
    %s641 = scalar_lea.sflag [#allocation4], 1
    %642 = vsyncpa %s641, 1
    %643 = vsyncpa [#allocation7], 1
    %644 = vsyncpa [#allocation5], 1
    %s645 = scalar_lea.sflag [#allocation5], 1
    %646 = vsyncpa %s645, 1

// kernel: tpu_custom_call.1
$region0: #{tpu_custom_call.1}
  #allocation0 [shape = 'u32[]', space=smem, size = 0x4, offset = 0x4, fixed_abs, tag = 'smem constant byte address 0x4 - core index']
  #allocation1 [shape = 'u32[144,128]{1,0:T(1,128)}', space=vmem, size = 0x12000, scoped, tag = 'internal scratch']
  #allocation2 [shape = 'bf16[8,32]{1,0:T(8,128)(2,1)}', space=vmem, size = 0x800, scoped, tag = 'scratch operand']
  %s0 = inlined_call_operand.hbm [shape: f32[2,8,32], index: 0, kind: input, shape index: {}]
  %s1 = inlined_call_operand.hbm [shape: bf16[32,96], index: 1, kind: input, shape index: {}]
  %s2 = inlined_call_operand.hbm [shape: bf16[32,32], index: 2, kind: input, shape index: {}]
  %s3 = inlined_call_operand.vmem [shape: f32[1,32], index: 3, kind: input, shape index: {}]
  %s4 = inlined_call_operand.hbm [shape: f32[2,8,32], index: 4, kind: output, shape index: {}]
  %s5 = sld [smem:[#allocation0]]
  $region61: #{tpu_custom_call.1} parent=0
    _
  %s7 = ssub.s32 1, %s5
  %s8 = scalar_select 0, %s7, %s5
  $region1: #{tpu_custom_call.1} parent=0
    #allocation3 [shape = 'u8[8192]{0}', space=vmem, size = 0x2000, scoped, tag = 'input window, operand 0']
    #allocation4 [shape = 's32[2]{0}', space=sflag, size = 0x8, scoped, tag = 'scoped memory for tpu_custom_call.1']
    #allocation5 [shape = 's32[2]{0}', space=sflag, size = 0x8, scoped, tag = 'scoped memory for tpu_custom_call.1']
    #allocation6 [shape = 'u8[8192]{0}', space=vmem, size = 0x2000, scoped, tag = 'input window, operand 1, single buffered']
    #allocation7 [shape = 's32[1]{0}', space=sflag, size = 0x4, scoped, tag = 'scoped memory for tpu_custom_call.1']
    #allocation8 [shape = 'u8[8192]{0}', space=vmem, size = 0x2000, scoped, tag = 'input window, operand 2, single buffered']
    #allocation9 [shape = 'u8[8192]{0}', space=vmem, size = 0x2000, scoped, tag = 'output window, operand 0']
    %9 = vsyncpa [#allocation4], 0
    %s10 = scalar_lea.sflag [#allocation4], 1
    %11 = vsyncpa %s10, 0
    %12 = vsyncpa [#allocation7], 0
    %13 = vsyncpa [#allocation5], 0
    %s14 = scalar_lea.sflag [#allocation5], 1
    %15 = vsyncpa %s14, 0
    loop: start=0, step=1, limit=4
    $region2: #{tpu_custom_call.1} parent=1 // loop_pre_header
      _
    $region3: #{tpu_custom_call.1} parent=1 // loop_header
      %s17 = sphi 0, %s21
      %p18 = scmp.ge.s32.totalorder %s17, 4
      %s27 = sphi 0, %s29
      %s30 = sphi 0, %s27
      %s31 = sphi 0, %s30
      %s47 = sphi 0, %s31
      %s51 = sphi 0, %s51
      %s53 = sphi 0, %s51
      %s54 = sphi 0, %s53
      %s68 = sphi 0, %s54
      %s72 = sphi 0, %s72
      %s74 = sphi 0, %s72
      %s75 = sphi 0, %s74
      %s89 = sphi 0, %s75
      %s93 = sphi 0, %s93
      %s95 = sphi 0, %s93
      %s96 = sphi 0, %s95
      %s110 = sphi 0, %s96
      %s116 = sphi 0, %s118
      %s119 = sphi 0, %s116
      %s120 = sphi 0, %s119
      %s136 = sphi 0, %s120
    $region4: #{tpu_custom_call.1} parent=1 // loop_header_branch
      %20 = sbr.rel (%p18) target = $region8
    $region5: #{tpu_custom_call.1} parent=1 // loop_body
      %s22 = ssub.s32 %s17, 1
      %s23 = ssub.s32 %s17, 2
      %s24 = sadd.s32 %s17, 1
      %s25 = ssub.s32 %s17, %s24
      %p26 = scmp.eq.s32.totalorder %s25, 0
      %s28 = sadd.s32 %s27, 1
      %s29 = scalar_select %p26, %s27, %s28
      %p32 = pneg %p26
      %p33 = scmp.eq.s32.totalorder %s17, 1
      %p34 = por %p32, %p33
      %p35 = scmp.ne.s32.totalorder %s27, %s30
      %p36 = scmp.eq.s32.totalorder %s17, 0
      %p37 = por %p35, %p36
      %p38 = scmp.ne.s32.totalorder %s27, %s30
      %p39 = scmp.eq.s32.totalorder %s22, 1
      %p40 = por %p38, %p39
      %p41 = scmp.ne.s32.totalorder %s30, %s31
      %p42 = scmp.eq.s32.totalorder %s22, 0
      %p43 = por %p41, %p42
      %p44 = scmp.ne.s32.totalorder %s30, %s31
      %p45 = scmp.eq.s32.totalorder %s23, 1
      %p46 = por %p44, %p45
      %p48 = scmp.ne.s32.totalorder %s31, %s47
      %p49 = scmp.eq.s32.totalorder %s23, 0
      %p50 = por %p48, %p49
      %s52 = sadd.s32 %s51, 1
      %p55 = scmp.eq.s32.totalorder %s17, 1
      %p56 = scmp.ne.s32.totalorder %s51, %s53
      %p57 = scmp.eq.s32.totalorder %s17, 0
      %p58 = por %p56, %p57
      %p59 = scmp.ne.s32.totalorder %s51, %s53
      %p60 = scmp.eq.s32.totalorder %s22, 1
      %p61 = por %p59, %p60
      %p62 = scmp.ne.s32.totalorder %s53, %s54
      %p63 = scmp.eq.s32.totalorder %s22, 0
      %p64 = por %p62, %p63
      %p65 = scmp.ne.s32.totalorder %s53, %s54
      %p66 = scmp.eq.s32.totalorder %s23, 1
      %p67 = por %p65, %p66
      %p69 = scmp.ne.s32.totalorder %s54, %s68
      %p70 = scmp.eq.s32.totalorder %s23, 0
      %p71 = por %p69, %p70
      %s73 = sadd.s32 %s72, 1
      %p76 = scmp.eq.s32.totalorder %s17, 1
      %p77 = scmp.ne.s32.totalorder %s72, %s74
      %p78 = scmp.eq.s32.totalorder %s17, 0
      %p79 = por %p77, %p78
      %p80 = scmp.ne.s32.totalorder %s72, %s74
      %p81 = scmp.eq.s32.totalorder %s22, 1
      %p82 = por %p80, %p81
      %p83 = scmp.ne.s32.totalorder %s74, %s75
      %p84 = scmp.eq.s32.totalorder %s22, 0
      %p85 = por %p83, %p84
      %p86 = scmp.ne.s32.totalorder %s74, %s75
      %p87 = scmp.eq.s32.totalorder %s23, 1
      %p88 = por %p86, %p87
      %p90 = scmp.ne.s32.totalorder %s75, %s89
      %p91 = scmp.eq.s32.totalorder %s23, 0
      %p92 = por %p90, %p91
      %s94 = sadd.s32 %s93, 1
      %p97 = scmp.eq.s32.totalorder %s17, 1
      %p98 = scmp.ne.s32.totalorder %s93, %s95
      %p99 = scmp.eq.s32.totalorder %s17, 0
      %p100 = por %p98, %p99
      %p101 = scmp.ne.s32.totalorder %s93, %s95
      %p102 = scmp.eq.s32.totalorder %s22, 1
      %p103 = por %p101, %p102
      %p104 = scmp.ne.s32.totalorder %s95, %s96
      %p105 = scmp.eq.s32.totalorder %s22, 0
      %p106 = por %p104, %p105
      %p107 = scmp.ne.s32.totalorder %s95, %s96
      %p108 = scmp.eq.s32.totalorder %s23, 1
      %p109 = por %p107, %p108
      %p111 = scmp.ne.s32.totalorder %s96, %s110
      %p112 = scmp.eq.s32.totalorder %s23, 0
      %p113 = por %p111, %p112
      %s114 = ssub.s32 %s17, %s24
      %p115 = scmp.eq.s32.totalorder %s114, 0
      %s117 = sadd.s32 %s116, 1
      %s118 = scalar_select %p115, %s116, %s117
      %p121 = pneg %p115
      %p122 = scmp.eq.s32.totalorder %s17, 1
      %p123 = por %p121, %p122
      %p124 = scmp.ne.s32.totalorder %s116, %s119
      %p125 = scmp.eq.s32.totalorder %s17, 0
      %p126 = por %p124, %p125
      %p127 = scmp.ne.s32.totalorder %s116, %s119
      %p128 = scmp.eq.s32.totalorder %s22, 1
      %p129 = por %p127, %p128
      %p130 = scmp.ne.s32.totalorder %s119, %s120
      %p131 = scmp.eq.s32.totalorder %s22, 0
      %p132 = por %p130, %p131
      %p133 = scmp.ne.s32.totalorder %s119, %s120
      %p134 = scmp.eq.s32.totalorder %s23, 1
      %p135 = por %p133, %p134
      %p137 = scmp.ne.s32.totalorder %s120, %s136
      %p138 = scmp.eq.s32.totalorder %s23, 0
      %p139 = por %p137, %p138
      %p140 = scmp.le.s32.totalorder 1, %s17
      %p141 = scmp.lt.s32.totalorder %s17, 3
      %p142 = pnand %p140, %p141
      %p143 = pneg %p142
      // Predicated region
      $region9: #{tpu_custom_call.1} parent=5 // pred_check
        _
      $region10: #{tpu_custom_call.1} parent=5 // pred_check_branch
        %145 = sbr.rel (%p142) target = $region12
      $region11: #{tpu_custom_call.1} parent=5 // pred_region
        %s146 = ssub.s32 %s17, 1
        // Predicated region
        $region13: #{tpu_custom_call.1} parent=11 // pred_check
          %p147 = pneg %p64
        $region14: #{tpu_custom_call.1} parent=11 // pred_check_branch
          %149 = sbr.rel (%p147) target = $region16
        $region15: #{tpu_custom_call.1} parent=11 // pred_region
          %s151 = ssub.s32 256, 256
          %152 = vsyncadd [#allocation7], %s151
          %s153 = sshll.u32 [#allocation6], 4
          %s154 = int_to_ptr.vmem [resolvable:$true] %s153
          %159 = dma.hbm_to_vmem [thread:$0]  %s1, 256, %s154, [#allocation7], 64, 64, 4
        $region16: #{tpu_custom_call.1} parent=11 // pred_fallthru
          _
        // Predicated region
        $region17: #{tpu_custom_call.1} parent=11 // pred_check
          %p160 = pneg %p85
        $region18: #{tpu_custom_call.1} parent=11 // pred_check_branch
          %162 = sbr.rel (%p160) target = $region20
        $region19: #{tpu_custom_call.1} parent=11 // pred_region
          %s164 = ssub.s32 256, 256
          %165 = vsyncadd [#allocation7], %s164
          %s166 = sshll.u32 [#allocation8], 4
          %s167 = int_to_ptr.vmem [resolvable:$true] %s166
          %172 = dma.hbm_to_vmem [thread:$0]  %s2, 256, %s167, [#allocation7], 64, 64, 4
        $region20: #{tpu_custom_call.1} parent=11 // pred_fallthru
          _
        // Predicated region
        $region21: #{tpu_custom_call.1} parent=11 // pred_check
          %p173 = pneg %p106
        $region22: #{tpu_custom_call.1} parent=11 // pred_check_branch
          %175 = sbr.rel (%p173) target = $region24
        $region23: #{tpu_custom_call.1} parent=11 // pred_region
          _
        $region24: #{tpu_custom_call.1} parent=11 // pred_fallthru
          _
      $region12: #{tpu_custom_call.1} parent=5 // pred_fallthru
        _
      %p176 = scmp.lt.s32.totalorder %s17, 2
      // Predicated region
      $region25: #{tpu_custom_call.1} parent=5 // pred_check
        %p177 = pneg %p176
      $region26: #{tpu_custom_call.1} parent=5 // pred_check_branch
        %179 = sbr.rel (%p177) target = $region28
      $region27: #{tpu_custom_call.1} parent=5 // pred_region
        // Predicated region
        $region29: #{tpu_custom_call.1} parent=27 // pred_check
          %p180 = pneg %p37
        $region30: #{tpu_custom_call.1} parent=27 // pred_check_branch
          %182 = sbr.rel (%p180) target = $region32
        $region31: #{tpu_custom_call.1} parent=27 // pred_region
          %s183 = sand.u32 %s27, 1
          %s184 = scalar_lea.sflag [#allocation4], %s183
          %s185 = sand.u32 %s27, 1
          %s186 = smul.addr %s185, 8
          %s187 = scalar_lea.vmem [#allocation3], %s186
          %s189 = ssub.s32 128, 128
          %190 = vsyncadd %s184, %s189
          %s191 = smul.addr %s17, 128
          %s192 = scalar_lea.hbm %s0, %s191
          %s194 = sshll.u32 %s187, 4
          %s195 = int_to_ptr.vmem [resolvable:$true] %s194
          %197 = dma.hbm_to_vmem [thread:$0]  %s192, 128, %s195, %s184
        $region32: #{tpu_custom_call.1} parent=27 // pred_fallthru
          _
      $region28: #{tpu_custom_call.1} parent=5 // pred_fallthru
        _
      %p198 = scmp.le.s32.totalorder 1, %s17
      %p199 = scmp.lt.s32.totalorder %s17, 3
      %p200 = pnand %p198, %p199
      %p201 = pneg %p200
      // Predicated region
      $region33: #{tpu_custom_call.1} parent=5 // pred_check
        _
      $region34: #{tpu_custom_call.1} parent=5 // pred_check_branch
        %203 = sbr.rel (%p200) target = $region36
      $region35: #{tpu_custom_call.1} parent=5 // pred_region
        %s204 = ssub.s32 %s17, 1
        %s205 = sand.u32 %s30, 1
        %s206 = scalar_lea.sflag [#allocation4], %s205
        %s207 = sand.u32 %s30, 1
        %s208 = smul.addr %s207, 8
        %s209 = scalar_lea.vmem [#allocation3], %s208
        // Predicated region
        $region37: #{tpu_custom_call.1} parent=35 // pred_check
          %p210 = pneg %p43
        $region38: #{tpu_custom_call.1} parent=35 // pred_check_branch
          %212 = sbr.rel (%p210) target = $region40
        $region39: #{tpu_custom_call.1} parent=35 // pred_region
          %213 = dma.done %s206, 128
        $region40: #{tpu_custom_call.1} parent=35 // pred_fallthru
          _
        // Predicated region
        $region41: #{tpu_custom_call.1} parent=35 // pred_check
          %p214 = pneg %p64
        $region42: #{tpu_custom_call.1} parent=35 // pred_check_branch
          %216 = sbr.rel (%p214) target = $region44
        $region43: #{tpu_custom_call.1} parent=35 // pred_region
          %217 = dma.done [#allocation7], 256
        $region44: #{tpu_custom_call.1} parent=35 // pred_fallthru
          _
        // Predicated region
        $region45: #{tpu_custom_call.1} parent=35 // pred_check
          %p218 = pneg %p85
        $region46: #{tpu_custom_call.1} parent=35 // pred_check_branch
          %220 = sbr.rel (%p218) target = $region48
        $region47: #{tpu_custom_call.1} parent=35 // pred_region
          %221 = dma.done [#allocation7], 256
        $region48: #{tpu_custom_call.1} parent=35 // pred_fallthru
          _
        %s222 = sand.u32 %s30, 1
        %s223 = scalar_lea.sflag [#allocation4], %s222
        %s224 = sand.u32 %s30, 1
        %s225 = smul.addr %s224, 8
        %s226 = scalar_lea.vmem [#allocation3], %s225
        %p227 = pneg %p43
        %p228 = pneg %p40
        %p229 = pneg %p64
        %p230 = pneg %p61
        %p231 = pneg %p85
        %p232 = pneg %p82
        %p233 = pneg %p106
        %p234 = pneg %p103
        %p235 = pneg %p132
        %p236 = pneg %p129
        %s237 = sand.u32 %s119, 1
        %s238 = scalar_lea.sflag [#allocation5], %s237
        %s239 = sand.u32 %s119, 1
        %s240 = smul.addr %s239, 8
        %s241 = scalar_lea.vmem [#allocation9], %s240
        %v243 = vld [vmem:[%s209] sm:$0xff]
        %v244 = vpack.c.bf16 %v243, %v243
        %v245 = vld [vmem:[#allocation6] sm:$0xf]
        %v246 = vld [vmem:[#allocation6 + $0x4] sm:$0xf]
        %v247 = vld [vmem:[#allocation6 + $0x8] sm:$0xf]
        %v248 = vld [vmem:[#allocation6 + $0xc] sm:$0xf]
        %v253 = vunpack.c.l.b16 %v245
        %v254 = vunpack.c.l.b16 %v246
        %v255 = vunpack.c.l.b16 %v247
        %v256 = vunpack.c.l.b16 %v248
        %v257 = vpack.c.b16 %v254, %v253
        %v258 = vpack.c.b16 %v256, %v255
        %vm261 = vcmask 261120
        %v263 = vsel %vm261, %v244, 0
        %265 = vmatprep.subr.bf16.mxu0 0
        %266 = vmatpush1.bf16.msra.mxu0 %v257
        %267 = vmatprep.subr.bf16.mxu0 0
        %268 = vmatpush1.bf16.msra.mxu0 %v258
        %269 = vmatprep.subr.bf16.mxu0 0
        %270 = vmatpush1.bf16.msra.mxu0 0
        %271 = vmatprep.subr.bf16.mxu0 0
        %272 = vmatpush1.bf16.msra.mxu0 0
        %273 = vmatprep.subr.bf16.mxu0 0
        %274 = vmatpush1.bf16.msra.mxu0 0
        %275 = vmatprep.subr.bf16.mxu0 0
        %276 = vmatpush1.bf16.msra.mxu0 0
        %277 = vmatprep.subr.bf16.mxu0 0
        %278 = vmatpush1.bf16.msra.mxu0 0
        %279 = vmatprep.subr.bf16.mxu0 0
        %280 = vmatpush1.bf16.msra.mxu0 0
        %281 = vmatprep.subr.bf16.mxu0 0
        %282 = vmatpush1.bf16.msra.mxu0 0
        %283 = vmatprep.subr.bf16.mxu0 0
        %284 = vmatpush1.bf16.msra.mxu0 0
        %285 = vmatprep.subr.bf16.mxu0 0
        %286 = vmatpush1.bf16.msra.mxu0 0
        %287 = vmatprep.subr.bf16.mxu0 0
        %288 = vmatpush1.bf16.msra.mxu0 0
        %289 = vmatprep.subr.bf16.mxu0 0
        %290 = vmatpush1.bf16.msra.mxu0 0
        %291 = vmatprep.subr.bf16.mxu0 0
        %292 = vmatpush1.bf16.msra.mxu0 0
        %293 = vmatprep.subr.bf16.mxu0 0
        %294 = vmatpush1.bf16.msra.mxu0 0
        %295 = vmatprep.subr.bf16.mxu0 0
        %296 = vmatpush1.bf16.msra.mxu0 0
        %297 = vmatprep.mubr.bf16.mxu0 0
        %298 = vmatmul.mubr.bf16.gmra.mrb[0].mxu0 %v263
        %v299 = vpop.f32.mrb[0].mxu0
        %v300 = vadd.f32 0.0, %v299
        %v301 = vpop.f32.mrb[0].mxu0
        %v302 = vpop.f32.mrb[0].mxu0
        %v303 = vpop.f32.mrb[0].mxu0
        %304 = vdwg.mxu0
        %v305 = vpack.c.bf16 %v300, %v300
        %307 = vrot.lane.b32.xlu0 %v305, 96
        %v308 = vpop.permute.xlu0 %307
        %vm309 = vcmask 130048
        %v311 = vsel %vm309, %v305, 0
        %v314 = vsel %vm309, %v308, 0
        %316 = vmatprep.subr.bf16.mxu0 0
        %317 = vmatpush1.bf16.xpose.msra.mxu0 %v314
        %318 = vmatprep.subr.bf16.mxu0 0
        %319 = vmatpush1.bf16.xpose.msra.mxu0 0
        %320 = vmatprep.subr.bf16.mxu0 0
        %321 = vmatpush1.bf16.xpose.msra.mxu0 0
        %322 = vmatprep.subr.bf16.mxu0 0
        %323 = vmatpush1.bf16.xpose.msra.mxu0 0
        %324 = vmatprep.subr.bf16.mxu0 0
        %325 = vmatpush1.bf16.xpose.msra.mxu0 0
        %326 = vmatprep.subr.bf16.mxu0 0
        %327 = vmatpush1.bf16.xpose.msra.mxu0 0
        %328 = vmatprep.subr.bf16.mxu0 0
        %329 = vmatpush1.bf16.xpose.msra.mxu0 0
        %330 = vmatprep.subr.bf16.mxu0 0
        %331 = vmatpush1.bf16.xpose.msra.mxu0 0
        %332 = vmatprep.subr.bf16.mxu0 0
        %333 = vmatpush1.bf16.xpose.msra.mxu0 0
        %334 = vmatprep.subr.bf16.mxu0 0
        %335 = vmatpush1.bf16.xpose.msra.mxu0 0
        %336 = vmatprep.subr.bf16.mxu0 0
        %337 = vmatpush1.bf16.xpose.msra.mxu0 0
        %338 = vmatprep.subr.bf16.mxu0 0
        %339 = vmatpush1.bf16.xpose.msra.mxu0 0
        %340 = vmatprep.subr.bf16.mxu0 0
        %341 = vmatpush1.bf16.xpose.msra.mxu0 0
        %342 = vmatprep.subr.bf16.mxu0 0
        %343 = vmatpush1.bf16.xpose.msra.mxu0 0
        %344 = vmatprep.subr.bf16.mxu0 0
        %345 = vmatpush1.bf16.xpose.msra.mxu0 0
        %346 = vmatprep.subr.bf16.mxu0 0
        %347 = vmatpush1.bf16.xpose.msra.mxu0 0
        %348 = vmatprep.mubr.bf16.mxu0 0
        %349 = vmatmul.mubr.bf16.gmra.mrb[0].mxu0 %v311
        %v350 = vpop.f32.mrb[0].mxu0
        %v351 = vadd.f32 0.0, %v350
        %v352 = vpop.f32.mrb[0].mxu0
        %v353 = vpop.f32.mrb[0].mxu0
        %v354 = vpop.f32.mrb[0].mxu0
        %355 = vdwg.mxu0
        %vm356 = vcmask 64512
        %v357 = vsel %vm356, %v351, -inf
        %358 = vmax.xlane.f32.xlu0 %v357
        %v359 = vpop.xlane.xlu0 %358
        %v360 = vsub.f32 %v351, %v359
        %v361 = vmul.f32 %v360, 1.442695
        %v362 = vpow.pop %v361
        %v363 = vsel %vm356, %v362, 0.0
        %364 = vadd.xlane.f32.xlu0 %v363
        %v365 = vpop.xlane.xlu0 %364
        %v366 = vrcp.pop %v365
        %v367 = vmul.f32 %v362, %v366
        %v368 = vpack.c.bf16 %v367, %v367
        %369 = vrot.lane.b32.xlu0 %v305, 64
        %v370 = vpop.permute.xlu0 %369
        %v372 = vsel %vm356, %v368, 0
        %vm374 = vcmask 1043456
        %v376 = vsel %vm374, %v370, 0
        %378 = vmatprep.subr.bf16.mxu0 0
        %379 = vmatpush1.bf16.msra.mxu0 %v376
        %380 = vmatprep.subr.bf16.mxu0 0
        %381 = vmatpush1.bf16.msra.mxu0 0
        %382 = vmatprep.subr.bf16.mxu0 0
        %383 = vmatpush1.bf16.msra.mxu0 0
        %384 = vmatprep.subr.bf16.mxu0 0
        %385 = vmatpush1.bf16.msra.mxu0 0
        %386 = vmatprep.subr.bf16.mxu0 0
        %387 = vmatpush1.bf16.msra.mxu0 0
        %388 = vmatprep.subr.bf16.mxu0 0
        %389 = vmatpush1.bf16.msra.mxu0 0
        %390 = vmatprep.subr.bf16.mxu0 0
        %391 = vmatpush1.bf16.msra.mxu0 0
        %392 = vmatprep.subr.bf16.mxu0 0
        %393 = vmatpush1.bf16.msra.mxu0 0
        %394 = vmatprep.subr.bf16.mxu0 0
        %395 = vmatpush1.bf16.msra.mxu0 0
        %396 = vmatprep.subr.bf16.mxu0 0
        %397 = vmatpush1.bf16.msra.mxu0 0
        %398 = vmatprep.subr.bf16.mxu0 0
        %399 = vmatpush1.bf16.msra.mxu0 0
        %400 = vmatprep.subr.bf16.mxu0 0
        %401 = vmatpush1.bf16.msra.mxu0 0
        %402 = vmatprep.subr.bf16.mxu0 0
        %403 = vmatpush1.bf16.msra.mxu0 0
        %404 = vmatprep.subr.bf16.mxu0 0
        %405 = vmatpush1.bf16.msra.mxu0 0
        %406 = vmatprep.subr.bf16.mxu0 0
        %407 = vmatpush1.bf16.msra.mxu0 0
        %408 = vmatprep.subr.bf16.mxu0 0
        %409 = vmatpush1.bf16.msra.mxu0 0
        %410 = vmatprep.mubr.bf16.mxu0 0
        %411 = vmatmul.mubr.bf16.gmra.mrb[0].mxu0 %v372
        %v412 = vpop.f32.mrb[0].mxu0
        %v413 = vadd.f32 0.0, %v412
        %v414 = vpop.f32.mrb[0].mxu0
        %v415 = vpop.f32.mrb[0].mxu0
        %v416 = vpop.f32.mrb[0].mxu0
        %417 = vdwg.mxu0
        %v418 = vpack.c.bf16 %v413, %v413
        %vm419 = vcmask 125952
        %420 = vst.msk [vmem:[#allocation2] sm:$0xf] %vm419, %v418
        %421 = vrot.lane.b32.xlu0 %v305, 112
        %v422 = vpop.permute.xlu0 %421
        %423 = vrot.lane.b32.xlu0 %v305, 80
        %v424 = vpop.permute.xlu0 %423
        %v426 = vsel %vm309, %v422, 0
        %v429 = vsel %vm309, %v424, 0
        %431 = vmatprep.subr.bf16.mxu0 0
        %432 = vmatpush1.bf16.xpose.msra.mxu0 %v429
        %433 = vmatprep.subr.bf16.mxu0 0
        %434 = vmatpush1.bf16.xpose.msra.mxu0 0
        %435 = vmatprep.subr.bf16.mxu0 0
        %436 = vmatpush1.bf16.xpose.msra.mxu0 0
        %437 = vmatprep.subr.bf16.mxu0 0
        %438 = vmatpush1.bf16.xpose.msra.mxu0 0
        %439 = vmatprep.subr.bf16.mxu0 0
        %440 = vmatpush1.bf16.xpose.msra.mxu0 0
        %441 = vmatprep.subr.bf16.mxu0 0
        %442 = vmatpush1.bf16.xpose.msra.mxu0 0
        %443 = vmatprep.subr.bf16.mxu0 0
        %444 = vmatpush1.bf16.xpose.msra.mxu0 0
        %445 = vmatprep.subr.bf16.mxu0 0
        %446 = vmatpush1.bf16.xpose.msra.mxu0 0
        %447 = vmatprep.subr.bf16.mxu0 0
        %448 = vmatpush1.bf16.xpose.msra.mxu0 0
        %449 = vmatprep.subr.bf16.mxu0 0
        %450 = vmatpush1.bf16.xpose.msra.mxu0 0
        %451 = vmatprep.subr.bf16.mxu0 0
        %452 = vmatpush1.bf16.xpose.msra.mxu0 0
        %453 = vmatprep.subr.bf16.mxu0 0
        %454 = vmatpush1.bf16.xpose.msra.mxu0 0
        %455 = vmatprep.subr.bf16.mxu0 0
        %456 = vmatpush1.bf16.xpose.msra.mxu0 0
        %457 = vmatprep.subr.bf16.mxu0 0
        %458 = vmatpush1.bf16.xpose.msra.mxu0 0
        %459 = vmatprep.subr.bf16.mxu0 0
        %460 = vmatpush1.bf16.xpose.msra.mxu0 0
        %461 = vmatprep.subr.bf16.mxu0 0
        %462 = vmatpush1.bf16.xpose.msra.mxu0 0
        %463 = vmatprep.mubr.bf16.mxu0 0
        %464 = vmatmul.mubr.bf16.gmra.mrb[0].mxu0 %v426
        %v465 = vpop.f32.mrb[0].mxu0
        %v466 = vadd.f32 0.0, %v465
        %v467 = vpop.f32.mrb[0].mxu0
        %v468 = vpop.f32.mrb[0].mxu0
        %v469 = vpop.f32.mrb[0].mxu0
        %470 = vdwg.mxu0
        %v471 = vsel %vm356, %v466, -inf
        %472 = vmax.xlane.f32.xlu0 %v471
        %v473 = vpop.xlane.xlu0 %472
        %v474 = vsub.f32 %v466, %v473
        %v475 = vmul.f32 %v474, 1.442695
        %v476 = vpow.pop %v475
        %v477 = vsel %vm356, %v476, 0.0
        %478 = vadd.xlane.f32.xlu0 %v477
        %v479 = vpop.xlane.xlu0 %478
        %v480 = vrcp.pop %v479
        %v481 = vmul.f32 %v476, %v480
        %v482 = vpack.c.bf16 %v481, %v481
        %483 = vrot.lane.b32.xlu0 %v305, 48
        %v484 = vpop.permute.xlu0 %483
        %v486 = vsel %vm356, %v482, 0
        %v489 = vsel %vm374, %v484, 0
        %491 = vmatprep.subr.bf16.mxu0 0
        %492 = vmatpush1.bf16.msra.mxu0 %v489
        %493 = vmatprep.subr.bf16.mxu0 0
        %494 = vmatpush1.bf16.msra.mxu0 0
        %495 = vmatprep.subr.bf16.mxu0 0
        %496 = vmatpush1.bf16.msra.mxu0 0
        %497 = vmatprep.subr.bf16.mxu0 0
        %498 = vmatpush1.bf16.msra.mxu0 0
        %499 = vmatprep.subr.bf16.mxu0 0
        %500 = vmatpush1.bf16.msra.mxu0 0
        %501 = vmatprep.subr.bf16.mxu0 0
        %502 = vmatpush1.bf16.msra.mxu0 0
        %503 = vmatprep.subr.bf16.mxu0 0
        %504 = vmatpush1.bf16.msra.mxu0 0
        %505 = vmatprep.subr.bf16.mxu0 0
        %506 = vmatpush1.bf16.msra.mxu0 0
        %507 = vmatprep.subr.bf16.mxu0 0
        %508 = vmatpush1.bf16.msra.mxu0 0
        %509 = vmatprep.subr.bf16.mxu0 0
        %510 = vmatpush1.bf16.msra.mxu0 0
        %511 = vmatprep.subr.bf16.mxu0 0
        %512 = vmatpush1.bf16.msra.mxu0 0
        %513 = vmatprep.subr.bf16.mxu0 0
        %514 = vmatpush1.bf16.msra.mxu0 0
        %515 = vmatprep.subr.bf16.mxu0 0
        %516 = vmatpush1.bf16.msra.mxu0 0
        %517 = vmatprep.subr.bf16.mxu0 0
        %518 = vmatpush1.bf16.msra.mxu0 0
        %519 = vmatprep.subr.bf16.mxu0 0
        %520 = vmatpush1.bf16.msra.mxu0 0
        %521 = vmatprep.subr.bf16.mxu0 0
        %522 = vmatpush1.bf16.msra.mxu0 0
        %523 = vmatprep.mubr.bf16.mxu0 0
        %524 = vmatmul.mubr.bf16.gmra.mrb[0].mxu0 %v486
        %v525 = vpop.f32.mrb[0].mxu0
        %v526 = vadd.f32 0.0, %v525
        %v527 = vpop.f32.mrb[0].mxu0
        %v528 = vpop.f32.mrb[0].mxu0
        %v529 = vpop.f32.mrb[0].mxu0
        %530 = vdwg.mxu0
        %v531 = vpack.c.bf16 %v526, %v526
        %v533 = vunpack.c.l.b16 %v531
        %v534 = vpack.c.b16 %v533, %v533
        %535 = vrot.lane.b32.xlu0 %v534, 16
        %v536 = vpop.permute.xlu0 %535
        %vm538 = vcmask 257152
        %539 = vst.msk [vmem:[#allocation2] sm:$0xf] %vm538, %v536
        %v540 = vld [vmem:[#allocation2] sm:$0xf]
        %v541 = vld [vmem:[#allocation8] sm:$0xf]
        %v542 = vld [vmem:[#allocation8 + $0x4] sm:$0xf]
        %v543 = vld [vmem:[#allocation8 + $0x8] sm:$0xf]
        %v544 = vld [vmem:[#allocation8 + $0xc] sm:$0xf]
        %v545 = vld [vmem:[%s3] sm:$0x1]
        %v547 = vlaneseq
        %v548 = vshrl.u32 %v547, 7
        %v549 = vsub.s32 0, %v548
        %v550 = vrot.slane %v545, %v549
        %v556 = vunpack.c.l.b16 %v541
        %v557 = vunpack.c.l.b16 %v542
        %v558 = vunpack.c.l.b16 %v543
        %v559 = vunpack.c.l.b16 %v544
        %v560 = vpack.c.b16 %v557, %v556
        %v561 = vpack.c.b16 %v559, %v558
        %v565 = vsel %vm261, %v540, 0
        %567 = vmatprep.subr.bf16.mxu0 0
        %568 = vmatpush1.bf16.msra.mxu0 %v560
        %569 = vmatprep.subr.bf16.mxu0 0
        %570 = vmatpush1.bf16.msra.mxu0 %v561
        %571 = vmatprep.subr.bf16.mxu0 0
        %572 = vmatpush1.bf16.msra.mxu0 0
        %573 = vmatprep.subr.bf16.mxu0 0
        %574 = vmatpush1.bf16.msra.mxu0 0
        %575 = vmatprep.subr.bf16.mxu0 0
        %576 = vmatpush1.bf16.msra.mxu0 0
        %577 = vmatprep.subr.bf16.mxu0 0
        %578 = vmatpush1.bf16.msra.mxu0 0
        %579 = vmatprep.subr.bf16.mxu0 0
        %580 = vmatpush1.bf16.msra.mxu0 0
        %581 = vmatprep.subr.bf16.mxu0 0
        %582 = vmatpush1.bf16.msra.mxu0 0
        %583 = vmatprep.subr.bf16.mxu0 0
        %584 = vmatpush1.bf16.msra.mxu0 0
        %585 = vmatprep.subr.bf16.mxu0 0
        %586 = vmatpush1.bf16.msra.mxu0 0
        %587 = vmatprep.subr.bf16.mxu0 0
        %588 = vmatpush1.bf16.msra.mxu0 0
        %589 = vmatprep.subr.bf16.mxu0 0
        %590 = vmatpush1.bf16.msra.mxu0 0
        %591 = vmatprep.subr.bf16.mxu0 0
        %592 = vmatpush1.bf16.msra.mxu0 0
        %593 = vmatprep.subr.bf16.mxu0 0
        %594 = vmatpush1.bf16.msra.mxu0 0
        %595 = vmatprep.subr.bf16.mxu0 0
        %596 = vmatpush1.bf16.msra.mxu0 0
        %597 = vmatprep.subr.bf16.mxu0 0
        %598 = vmatpush1.bf16.msra.mxu0 0
        %599 = vmatprep.mubr.bf16.mxu0 0
        %600 = vmatmul.mubr.bf16.gmra.mrb[0].mxu0 %v565
        %v601 = vpop.f32.mrb[0].mxu0
        %v602 = vadd.f32 %v550, %v601
        %v603 = vpop.f32.mrb[0].mxu0
        %v604 = vpop.f32.mrb[0].mxu0
        %v605 = vpop.f32.mrb[0].mxu0
        %606 = vdwg.mxu0
        %607 = vst.msk [vmem:[%s241] sm:$0xff] %vm261, %v602
        %s608 = sand.u32 %s119, 1
        %s609 = scalar_lea.sflag [#allocation5], %s608
        %s610 = sand.u32 %s119, 1
        %s611 = smul.addr %s610, 8
        %s612 = scalar_lea.vmem [#allocation9], %s611
        // Predicated region
        $region49: #{tpu_custom_call.1} parent=35 // pred_check
          %p613 = pneg %p129
        $region50: #{tpu_custom_call.1} parent=35 // pred_check_branch
          %615 = sbr.rel (%p613) target = $region52
        $region51: #{tpu_custom_call.1} parent=35 // pred_region
          %s617 = ssub.s32 128, 128
          %618 = vsyncadd %s609, %s617
          %s619 = smul.addr %s22, 128
          %s620 = scalar_lea.hbm %s4, %s619
          %s622 = sshll.u32 %s612, 4
          %s623 = int_to_ptr.vmem [resolvable:$true] %s622
          %625 = dma.vmem_to_hbm [thread:$0]  %s623, 128, %s620, %s609
        $region52: #{tpu_custom_call.1} parent=35 // pred_fallthru
          _
      $region36: #{tpu_custom_call.1} parent=5 // pred_fallthru
        _
      %p626 = scmp.le.s32.totalorder 2, %s17
      // Predicated region
      $region53: #{tpu_custom_call.1} parent=5 // pred_check
        %p627 = pneg %p626
      $region54: #{tpu_custom_call.1} parent=5 // pred_check_branch
        %629 = sbr.rel (%p627) target = $region56
      $region55: #{tpu_custom_call.1} parent=5 // pred_region
        %s630 = ssub.s32 %s17, 2
        // Predicated region
        $region57: #{tpu_custom_call.1} parent=55 // pred_check
          %p631 = pneg %p135
        $region58: #{tpu_custom_call.1} parent=55 // pred_check_branch
          %633 = sbr.rel (%p631) target = $region60
        $region59: #{tpu_custom_call.1} parent=55 // pred_region
          %s634 = sand.u32 %s120, 1
          %s635 = scalar_lea.sflag [#allocation5], %s634
          %s636 = sand.u32 %s120, 1
          %s637 = smul.addr %s636, 8
          %s638 = scalar_lea.vmem [#allocation9], %s637
          %639 = dma.done %s635, 128
        $region60: #{tpu_custom_call.1} parent=55 // pred_fallthru
          _
      $region56: #{tpu_custom_call.1} parent=5 // pred_fallthru
        _
    $region6: #{tpu_custom_call.1} parent=1 // loop_footer
      %s21 = sadd.s32 1, %s17
    $region7: #{tpu_custom_call.1} parent=1 // loop_footer_branch
      %16 = sbr.rel target = $region3
    $region8: #{tpu_custom_call.1} parent=1 // loop_exit
      _
    %640 = vsyncpa [#allocation4], 1
    %s641 = scalar_lea.sflag [#allocation4], 1
    %642 = vsyncpa %s641, 1
    %643 = vsyncpa [#allocation7], 1
    %644 = vsyncpa [#allocation5], 1
    %s645 = scalar_lea.sflag [#allocation5], 1
    %646 = vsyncpa %s645, 1

</llo_original>
